<compile_context>
chip_gen: v5e
topology: v5e:2x2
jax: 0.10.0
libtpu: 0.0.40
codegen_flags: <defaults>
</compile_context>

<pallas_src>
import functools

import jax
import jax.numpy as jnp
from jax.experimental import pallas as pl
from jax.experimental.pallas import tpu as pltpu


# ------------------------------ helpers ------------------------------------- #
def _round_up(v, m):
    return (v + m - 1) // m * m


def _pad2(a, rows, cols):
    pr, pc = rows - a.shape[0], cols - a.shape[1]
    if pr == 0 and pc == 0:
        return a
    return jnp.pad(a, ((0, pr), (0, pc)))


def _kn_plan(K, N):
    """Padded K/N and K-tile for a (K,N) weight. Single K step whenever the
    bf16 weight tile is <= 4 MiB (covers every layer of this model, incl. fc1
    for 84x84 inputs), so no per-k accumulator read-modify-write passes."""
    N_pad = _round_up(N, 128)
    K128 = _round_up(K, 128)
    if K128 * N_pad * 2 <= 4 * 1024 * 1024:
        return K128, N_pad, K128
    TK = 512
    return _round_up(K, TK), N_pad, TK


def _vmem_limit(TM, TK, N_pad, out_itemsize, multi_k):
    """vmem_limit_bytes from the actual tile footprint (double-buffered bf16
    operands + outputs + f32 acc) with 2x headroom, capped at v7x's 64 MiB."""
    need = (TM * TK + TK * N_pad) * 2 * 2          # x & w tiles, bf16, 2-deep
    need += TM * N_pad * out_itemsize * 2          # output tiles
    need += N_pad * 4 * 2                          # bias
    if multi_k:
        need += TM * N_pad * 4                     # f32 accumulator scratch
    return int(min(max(2 * need, 8 << 20), 64 << 20))


# --------------------------- tiled matmul kernels ---------------------------- #
def _matmul_kernel_acc(x_ref, w_ref, b_ref, o_ref, acc_ref, *, relu):
    """Multi-K-step variant: grid = (M tiles, K steps), f32 VMEM accumulator."""
    k = pl.program_id(1)

    @pl.when(k == 0)
    def _init():
        acc_ref[...] = jnp.zeros_like(acc_ref)

    acc_ref[...] += jnp.dot(x_ref[...], w_ref[...],
                            preferred_element_type=jnp.float32)

    @pl.when(k == pl.num_programs(1) - 1)
    def _finalize():
        out = acc_ref[...] + b_ref[...]
        if relu:
            out = jnp.maximum(out, 0.0)
        o_ref[...] = out.astype(o_ref.dtype)


def _matmul_kernel_1k(x_ref, w_ref, b_ref, o_ref, *, relu):
    """Single-K-step variant: no accumulator scratch, bias+ReLU fused."""
    out = jnp.dot(x_ref[...], w_ref[...],
                  preferred_element_type=jnp.float32) + b_ref[...]
    if relu:
        out = jnp.maximum(out, 0.0)
    o_ref[...] = out.astype(o_ref.dtype)


def linear_pallas(x, w_pad, b_pad, n_out, *, relu=False, out_dtype=jnp.float32):
    """y = relu?(x @ w + b). x:(M,K); w_pad:(K_pad,N_pad) bf16 pre-staged;
    b_pad:(1,N_pad) f32 pre-staged. bf16 MXU operands, f32 accumulation."""
    M, K = x.shape
    K_pad, N_pad, TK = _kn_plan(K, n_out)
    assert w_pad.shape == (K_pad, N_pad) and b_pad.shape == (1, N_pad), (
        w_pad.shape, b_pad.shape, (K_pad, N_pad))

    # Bigger M tiles when the output is only 128 lanes wide (conv layers) so
    # per-grid-step overhead and weight re-DMA amortize; 16-row multiples for
    # bf16 sublane packing.
    cap = 512 if N_pad <= 128 else 256
    TM = min(_round_up(M, 16), cap)
    M_pad = _round_up(M, TM)
    xp = _pad2(x.astype(jnp.bfloat16), M_pad, K_pad)

    out_isz = jnp.dtype(out_dtype).itemsize
    multi_k = K_pad != TK
    vmem = _vmem_limit(TM, TK, N_pad, out_isz, multi_k)

    if not multi_k:
        out = pl.pallas_call(
            functools.partial(_matmul_kernel_1k, relu=relu),
            out_shape=jax.ShapeDtypeStruct((M_pad, N_pad), out_dtype),
            grid_spec=pltpu.PrefetchScalarGridSpec(
                num_scalar_prefetch=0,
                grid=(M_pad // TM,),
                in_specs=[
                    pl.BlockSpec((TM, K_pad), lambda i: (i, 0)),
                    pl.BlockSpec((K_pad, N_pad), lambda i: (0, 0)),
                    pl.BlockSpec((1, N_pad), lambda i: (0, 0)),
                ],
                out_specs=pl.BlockSpec((TM, N_pad), lambda i: (i, 0)),
            ),
            compiler_params=pltpu.CompilerParams(
                dimension_semantics=("parallel",),
                vmem_limit_bytes=vmem,
            ),
        )(xp, w_pad, b_pad)
    else:
        out = pl.pallas_call(
            functools.partial(_matmul_kernel_acc, relu=relu),
            out_shape=jax.ShapeDtypeStruct((M_pad, N_pad), out_dtype),
            grid_spec=pltpu.PrefetchScalarGridSpec(
                num_scalar_prefetch=0,
                grid=(M_pad // TM, K_pad // TK),
                in_specs=[
                    pl.BlockSpec((TM, TK), lambda i, k: (i, k)),
                    pl.BlockSpec((TK, N_pad), lambda i, k: (k, 0)),
                    pl.BlockSpec((1, N_pad), lambda i, k: (0, 0)),
                ],
                out_specs=pl.BlockSpec((TM, N_pad), lambda i, k: (i, 0)),
                scratch_shapes=[pltpu.VMEM((TM, N_pad), jnp.float32)],
            ),
            compiler_params=pltpu.CompilerParams(
                dimension_semantics=("parallel", "arbitrary"),
                vmem_limit_bytes=vmem,
            ),
        )(xp, w_pad, b_pad)
    return out[:M, :n_out]


# ----------------------------- log-softmax head ------------------------------ #
def _log_softmax_kernel(q_ref, o_ref):
    q = q_ref[...]
    z = q - jnp.max(q, axis=-1, keepdims=True)
    o_ref[...] = z - jnp.log(jnp.sum(jnp.exp(z), axis=-1, keepdims=True))


def log_softmax_pallas(q3):
    """q3:(B, A, atoms) -> log_softmax over atoms."""
    B, A, T = q3.shape
    # TODO(synk): could be fused into the final matmul epilogue, but that needs
    # an in-register (TM, A*T)->(TM, A, T) lane-splitting reshape (or segmented
    # lane reductions); kept as a tiny standalone kernel for lowering robustness.
    return pl.pallas_call(
        _log_softmax_kernel,
        out_shape=jax.ShapeDtypeStruct((B, A, T), jnp.float32),
        in_specs=[pl.BlockSpec((B, A, T), lambda: (0, 0, 0))],
        out_specs=pl.BlockSpec((B, A, T), lambda: (0, 0, 0)),
    )(q3.astype(jnp.float32))


# --------------------------- conv via NHWC im2col ---------------------------- #
def _im2col_nhwc(x, kh, kw, stride):
    """x:(B,H,W,C) -> (B*oh*ow, kh*kw*C) with columns ordered (kh, kw, C)."""
    B, H, W, C = x.shape
    oh = (H - kh) // stride + 1
    ow = (W - kw) // stride + 1
    taps = []
    for i in range(kh):
        for j in range(kw):
            taps.append(jax.lax.slice(
                x, (0, i, j, 0),
                (B, i + stride * (oh - 1) + 1, j + stride * (ow - 1) + 1, C),
                (1, stride, stride, 1)))               # (B, oh, ow, C)
    p = jnp.stack(taps, axis=3)                        # (B, oh, ow, kh*kw, C)
    return p.reshape(B * oh * ow, kh * kw * C), oh, ow


def conv2d_pallas(x_nhwc, w_pad, b_pad, *, oc, kh, kw, stride, relu=True):
    """PyTorch-semantics Conv2d (valid padding), NHWC in/out, pre-staged weight."""
    B = x_nhwc.shape[0]
    cols, oh, ow = _im2col_nhwc(x_nhwc, kh, kw, stride)
    y = linear_pallas(cols, w_pad, b_pad, oc, relu=relu, out_dtype=jnp.bfloat16)
    return y.reshape(B, oh, ow, oc)


# ------------------------------ parameters ----------------------------------- #
def xavier_uniform(key, shape, fan_in, fan_out):
    a = (6.0 / (fan_in + fan_out)) ** 0.5
    return jax.random.uniform(key, shape, jnp.float32, -a, a)


def init_params(key, in_shape, out_dim, atom_num, dueling):
    c, h, w = in_shape
    cnn_out_dim = 64 * ((h - 28) // 8) * ((w - 28) // 8)
    ks = jax.random.split(key, 8)
    p = {
        "c1_w": xavier_uniform(ks[0], (32, c, 8, 8), c * 64, 32 * 64),
        "c1_b": jnp.zeros((32,), jnp.float32),
        "c2_w": xavier_uniform(ks[1], (64, 32, 4, 4), 32 * 16, 64 * 16),
        "c2_b": jnp.zeros((64,), jnp.float32),
        "c3_w": xavier_uniform(ks[2], (64, 64, 3, 3), 64 * 9, 64 * 9),
        "c3_b": jnp.zeros((64,), jnp.float32),
        # Linear weights stored transposed: (in, out); fc1 row order follows
        # torch's (c, y, x) Flatten order.
        "q1_w": xavier_uniform(ks[3], (cnn_out_dim, 256), cnn_out_dim, 256),
        "q1_b": jnp.zeros((256,), jnp.float32),
        "q2_w": xavier_uniform(ks[4], (256, out_dim * atom_num), 256,
                               out_dim * atom_num),
        "q2_b": jnp.zeros((out_dim * atom_num,), jnp.float32),
    }
    if dueling:
        p["s1_w"] = xavier_uniform(ks[5], (cnn_out_dim, 256), cnn_out_dim, 256)
        p["s1_b"] = jnp.zeros((256,), jnp.float32)
        p["s2_w"] = xavier_uniform(ks[6], (256, atom_num), 256, atom_num)
        p["s2_b"] = jnp.zeros((atom_num,), jnp.float32)
    return p


def _prep_linear(w, b):
    K, N = w.shape
    K_pad, N_pad, _ = _kn_plan(K, N)
    wp = _pad2(w.astype(jnp.bfloat16), K_pad, N_pad)
    bp = _pad2(b.reshape(1, N).astype(jnp.float32), 1, N_pad)
    return wp, bp


def prepare_params(params, in_shape, out_dim, atom_num, dueling):
    """One-time weight staging: layout transforms, dueling fold, bf16 cast and
    MXU-aligned zero padding. Run once, not per forward step."""
    c, h, w = in_shape
    h1, w1 = (h - 8) // 4 + 1, (w - 8) // 4 + 1
    h2, w2 = (h1 - 4) // 2 + 1, (w1 - 4) // 2 + 1
    h3, w3 = h2 - 2, w2 - 2
    C3 = 64
    A, T = out_dim, atom_num

    def prep_conv(w_pt, b):
        OC, IC, KH, KW = w_pt.shape
        # (OC,IC,KH,KW) -> (KH*KW*IC, OC); rows ordered (kh,kw,c) match im2col.
        w2d = jnp.transpose(w_pt, (2, 3, 1, 0)).reshape(KH * KW * IC, OC)
        return _prep_linear(w2d, b)

    def permute_fc_w(w_cyx):
        # Torch Flatten order (c, y, x) -> our NHWC flatten order (y, x, c).
        return (w_cyx.reshape(C3, h3, w3, -1).transpose(1, 2, 0, 3)
                .reshape(h3 * w3 * C3, -1))

    prep = {}
    prep["c1_w"], prep["c1_b"] = prep_conv(params["c1_w"], params["c1_b"])
    prep["c2_w"], prep["c2_b"] = prep_conv(params["c2_w"], params["c2_b"])
    prep["c3_w"], prep["c3_b"] = prep_conv(params["c3_w"], params["c3_b"])

    if dueling:
        # Fused q1|s1 hidden layer: one wide matmul producing 512 hidden units.
        w_fc1 = jnp.concatenate([permute_fc_w(params["q1_w"]),
                                 permute_fc_w(params["s1_w"])], axis=1)
        b_fc1 = jnp.concatenate([params["q1_b"], params["s1_b"]])
        # The dueling combine  s + q - mean_a(q)  is linear in the hidden
        # vector -> fold it into the final weights/bias so the last matmul
        # emits combined logits directly (no separate s path at runtime).
        w2q = params["q2_w"].reshape(-1, A, T)
        w_top = (w2q - jnp.mean(w2q, axis=1, keepdims=True)).reshape(-1, A * T)
        w_bot = jnp.tile(params["s2_w"], (1, A))         # col a*T+t -> s2_w[:, t]
        w_fc2 = jnp.concatenate([w_top, w_bot], axis=0)  # (512, A*T)
        b2q = params["q2_b"].reshape(A, T)
        b_fc2 = ((b2q - jnp.mean(b2q, axis=0, keepdims=True)).reshape(A * T)
                 + jnp.tile(params["s2_b"], A))
    else:
        w_fc1, b_fc1 = permute_fc_w(params["q1_w"]), params["q1_b"]
        w_fc2, b_fc2 = params["q2_w"], params["q2_b"]

    prep["fc1_w"], prep["fc1_b"] = _prep_linear(w_fc1, b_fc1)
    prep["fc2_w"], prep["fc2_b"] = _prep_linear(w_fc2, b_fc2)
    return prep


# ------------------------------ forward pass ---------------------------------- #
def cnn_forward(prep, x, *, out_dim, atom_num, dueling):
    B = x.shape[0]
    # Single NCHW -> NHWC conversion; bf16 halves downstream operand traffic.
    h = jnp.transpose(x, (0, 2, 3, 1)).astype(jnp.bfloat16)

    h = conv2d_pallas(h, prep["c1_w"], prep["c1_b"], oc=32, kh=8, kw=8, stride=4)
    h = conv2d_pallas(h, prep["c2_w"], prep["c2_b"], oc=64, kh=4, kw=4, stride=2)
    h = conv2d_pallas(h, prep["c3_w"], prep["c3_b"], oc=64, kh=3, kw=3, stride=1)

    latent = h.reshape(B, -1)                  # NHWC flatten (fc1 rows permuted)
    n_hid = 512 if dueling else 256
    hidden = linear_pallas(latent, prep["fc1_w"], prep["fc1_b"], n_hid,
                           relu=True, out_dtype=jnp.bfloat16)

    nq = out_dim * atom_num
    q = linear_pallas(hidden, prep["fc2_w"], prep["fc2_b"], nq,
                      relu=False, out_dtype=jnp.float32)  # dueling already folded

    if atom_num == 1:
        return q                               # (B, out_dim)
    return log_softmax_pallas(q.reshape(B, out_dim, atom_num))


# ----------------------- pure-JAX reference (verification) -------------------- #
def reference_forward(params, x, *, out_dim, atom_num, dueling):
    def conv(h, w, b, s):
        y = jax.lax.conv_general_dilated(
            h, w, (s, s), "VALID",
            dimension_numbers=("NCHW", "OIHW", "NCHW"))
        return jax.nn.relu(y + b.reshape(1, -1, 1, 1))

    h = conv(x, params["c1_w"], params["c1_b"], 4)
    h = conv(h, params["c2_w"], params["c2_b"], 2)
    h = conv(h, params["c3_w"], params["c3_b"], 1)
    B = x.shape[0]
    latent = h.reshape(B, -1)                               # torch (c,y,x) order
    hq = jax.nn.relu(latent @ params["q1_w"] + params["q1_b"])
    q = hq @ params["q2_w"] + params["q2_b"]
    if dueling:
        hs = jax.nn.relu(latent @ params["s1_w"] + params["s1_b"])
        s = hs @ params["s2_w"] + params["s2_b"]            # (B, atom_num)
    if atom_num == 1:
        if dueling:
            q = s + q - q.mean(1, keepdims=True)
        return q
    q = q.reshape(B, out_dim, atom_num)
    if dueling:
        q = s[:, None, :] + q - q.mean(1, keepdims=True)
    return jax.nn.log_softmax(q, axis=-1)


# --------------------------------- main --------------------------------------- #
if __name__ == "__main__":
    B = 2
    in_shape = (4, 36, 36)     # (c, h, w) -> cnn_out_dim = 64 * 1 * 1
    out_dim = 6
    key = jax.random.PRNGKey(0)

    for idx, (dueling, atom_num) in enumerate([(True, 4), (True, 1)]):
        kp, kx = jax.random.split(jax.random.fold_in(key, idx))
        params = init_params(kp, in_shape, out_dim, atom_num, dueling)
        x = jax.random.normal(kx, (B,) + in_shape, dtype=jnp.float32)

        prep = prepare_params(params, in_shape, out_dim, atom_num, dueling)
        fwd = jax.jit(functools.partial(cnn_forward, out_dim=out_dim,
                                        atom_num=atom_num, dueling=dueling))
        out = jax.block_until_ready(fwd(prep, x))

        expect = (B, out_dim, atom_num) if atom_num > 1 else (B, out_dim)
        assert out.shape == expect, out.shape
        assert bool(jnp.all(jnp.isfinite(out)))
        ref = reference_forward(params, x, out_dim=out_dim,
                                atom_num=atom_num, dueling=dueling)
        assert bool(jnp.allclose(out, ref, rtol=3e-2, atol=3e-2)), (
            float(jnp.max(jnp.abs(out - ref))))
        if atom_num > 1:
            prob_sum = jnp.sum(jnp.exp(out), axis=-1)
            assert bool(jnp.all(jnp.abs(prob_sum - 1.0) < 1e-3))

    # Exercise the multi-K-step accumulator matmul path (not hit by the CNN
    # shapes above) against a bf16-cast reference.
    ka, kb = jax.random.split(jax.random.fold_in(key, 99))
    xl = jax.random.normal(ka, (32, 20000), jnp.float32)
    wl = jax.random.normal(kb, (20000, 64), jnp.float32) * 0.01
    bl = jnp.zeros((64,), jnp.float32)
    wlp, blp = _prep_linear(wl, bl)
    yl = jax.block_until_ready(
        jax.jit(lambda a: linear_pallas(a, wlp, blp, 64))(xl))
    refl = (xl.astype(jnp.bfloat16).astype(jnp.float32)
            @ wl.astype(jnp.bfloat16).astype(jnp.float32))
    assert yl.shape == (32, 64)
    assert bool(jnp.allclose(yl, refl, rtol=1e-2, atol=5e-2))

    print("KERNEL_OK")
</pallas_src>

<mosaic_0001>
module attributes {stable_mosaic.version = 11 : i64} {
  func.func @_matmul_kernel_1k(%arg0: i32, %arg1: memref<128x256xbf16, #tpu.memory_space<vmem>>, %arg2: memref<256x128xbf16, #tpu.memory_space<vmem>>, %arg3: memref<1x128xf32, #tpu.memory_space<vmem>>, %arg4: memref<128x128xbf16, #tpu.memory_space<vmem>>) attributes {dimension_semantics = [#tpu.dimension_semantics<parallel>], iteration_bounds = array<i64: 1>, scalar_prefetch = 0 : i64, scratch_operands = 0 : i64, tpu.core_type = #tpu.core_type<tc>, window_params = [{transform_indices = @transform_0, window_bounds = array<i64: 128, 256>}, {pipeline_mode = #tpu.pipeline_mode<synchronous>, transform_indices = @transform_1, window_bounds = array<i64: 256, 128>}, {pipeline_mode = #tpu.pipeline_mode<synchronous>, transform_indices = @transform_2, window_bounds = array<i64: 1, 128>}, {transform_indices = @transform_3, window_bounds = array<i64: 128, 128>}]} {
    %c0 = arith.constant 0 : index
    %c0_0 = arith.constant 0 : index
    %0 = vector.load %arg1[%c0, %c0_0] : memref<128x256xbf16, #tpu.memory_space<vmem>>, vector<128x256xbf16>
    %c0_1 = arith.constant 0 : index
    %c0_2 = arith.constant 0 : index
    %1 = vector.load %arg2[%c0_1, %c0_2] : memref<256x128xbf16, #tpu.memory_space<vmem>>, vector<256x128xbf16>
    %cst = arith.constant dense<0.000000e+00> : vector<128x128xf32>
    %2 = tpu.matmul %0, %1, %cst {dimension_numbers = #tpu.dot_dimension_numbers<[1], [0], [0], [1], [0, 0, 1, 1], [], []>} : vector<128x256xbf16>, vector<256x128xbf16>, vector<128x128xf32> -> vector<128x128xf32>
    %c0_3 = arith.constant 0 : index
    %c0_4 = arith.constant 0 : index
    %3 = vector.load %arg3[%c0_3, %c0_4] : memref<1x128xf32, #tpu.memory_space<vmem>>, vector<1x128xf32>
    %4 = vector.broadcast %3 : vector<1x128xf32> to vector<128x128xf32>
    %5 = arith.addf %2, %4 : vector<128x128xf32>
    %cst_5 = arith.constant 0.000000e+00 : f32
    %6 = vector.broadcast %cst_5 : f32 to vector<128x128xf32>
    %7 = arith.maximumf %5, %6 : vector<128x128xf32>
    %8 = arith.truncf %7 : vector<128x128xf32> to vector<128x128xbf16>
    %c0_6 = arith.constant 0 : index
    %c0_7 = arith.constant 0 : index
    %9 = vector.load %arg4[%c0_6, %c0_7] : memref<128x128xbf16, #tpu.memory_space<vmem>>, vector<128x128xbf16>
    tpu.vector_store %arg4[%c0_6, %c0_7], %8 {strides = array<i32>} : memref<128x128xbf16, #tpu.memory_space<vmem>>, vector<128x128xbf16>,
    return
  }
  func.func @transform_0(%arg0: i32) -> (i32, i32) {
    %c0_i32 = arith.constant 0 : i32
    %c0_i32_0 = arith.constant 0 : i32
    return %arg0, %c0_i32 : i32, i32
  }
  func.func @transform_1(%arg0: i32) -> (i32, i32) {
    %c0_i32 = arith.constant 0 : i32
    %c0_i32_0 = arith.constant 0 : i32
    %c0_i32_1 = arith.constant 0 : i32
    return %c0_i32, %c0_i32_0 : i32, i32
  }
  func.func @transform_2(%arg0: i32) -> (i32, i32) {
    %c0_i32 = arith.constant 0 : i32
    %c0_i32_0 = arith.constant 0 : i32
    %c0_i32_1 = arith.constant 0 : i32
    return %c0_i32, %c0_i32_0 : i32, i32
  }
  func.func @transform_3(%arg0: i32) -> (i32, i32) {
    %c0_i32 = arith.constant 0 : i32
    %c0_i32_0 = arith.constant 0 : i32
    return %arg0, %c0_i32 : i32, i32
  }
}

module attributes {stable_mosaic.version = 11 : i64} {
  func.func @_matmul_kernel_1k(%arg0: i32, %arg1: memref<32x512xbf16, #tpu.memory_space<vmem>>, %arg2: memref<512x128xbf16, #tpu.memory_space<vmem>>, %arg3: memref<1x128xf32, #tpu.memory_space<vmem>>, %arg4: memref<32x128xbf16, #tpu.memory_space<vmem>>) attributes {dimension_semantics = [#tpu.dimension_semantics<parallel>], iteration_bounds = array<i64: 1>, scalar_prefetch = 0 : i64, scratch_operands = 0 : i64, tpu.core_type = #tpu.core_type<tc>, window_params = [{transform_indices = @transform_0, window_bounds = array<i64: 32, 512>}, {pipeline_mode = #tpu.pipeline_mode<synchronous>, transform_indices = @transform_1, window_bounds = array<i64: 512, 128>}, {pipeline_mode = #tpu.pipeline_mode<synchronous>, transform_indices = @transform_2, window_bounds = array<i64: 1, 128>}, {transform_indices = @transform_3, window_bounds = array<i64: 32, 128>}]} {
    %c0 = arith.constant 0 : index
    %c0_0 = arith.constant 0 : index
    %0 = vector.load %arg1[%c0, %c0_0] : memref<32x512xbf16, #tpu.memory_space<vmem>>, vector<32x512xbf16>
    %c0_1 = arith.constant 0 : index
    %c0_2 = arith.constant 0 : index
    %1 = vector.load %arg2[%c0_1, %c0_2] : memref<512x128xbf16, #tpu.memory_space<vmem>>, vector<512x128xbf16>
    %cst = arith.constant dense<0.000000e+00> : vector<32x128xf32>
    %2 = tpu.matmul %0, %1, %cst {dimension_numbers = #tpu.dot_dimension_numbers<[1], [0], [0], [1], [0, 0, 1, 1], [], []>} : vector<32x512xbf16>, vector<512x128xbf16>, vector<32x128xf32> -> vector<32x128xf32>
    %c0_3 = arith.constant 0 : index
    %c0_4 = arith.constant 0 : index
    %3 = vector.load %arg3[%c0_3, %c0_4] : memref<1x128xf32, #tpu.memory_space<vmem>>, vector<1x128xf32>
    %4 = vector.broadcast %3 : vector<1x128xf32> to vector<32x128xf32>
    %5 = arith.addf %2, %4 : vector<32x128xf32>
    %cst_5 = arith.constant 0.000000e+00 : f32
    %6 = vector.broadcast %cst_5 : f32 to vector<32x128xf32>
    %7 = arith.maximumf %5, %6 : vector<32x128xf32>
    %8 = arith.truncf %7 : vector<32x128xf32> to vector<32x128xbf16>
    %c0_6 = arith.constant 0 : index
    %c0_7 = arith.constant 0 : index
    %9 = vector.load %arg4[%c0_6, %c0_7] : memref<32x128xbf16, #tpu.memory_space<vmem>>, vector<32x128xbf16>
    tpu.vector_store %arg4[%c0_6, %c0_7], %8 {strides = array<i32>} : memref<32x128xbf16, #tpu.memory_space<vmem>>, vector<32x128xbf16>,
    return
  }
  func.func @transform_0(%arg0: i32) -> (i32, i32) {
    %c0_i32 = arith.constant 0 : i32
    %c0_i32_0 = arith.constant 0 : i32
    return %arg0, %c0_i32 : i32, i32
  }
  func.func @transform_1(%arg0: i32) -> (i32, i32) {
    %c0_i32 = arith.constant 0 : i32
    %c0_i32_0 = arith.constant 0 : i32
    %c0_i32_1 = arith.constant 0 : i32
    return %c0_i32, %c0_i32_0 : i32, i32
  }
  func.func @transform_2(%arg0: i32) -> (i32, i32) {
    %c0_i32 = arith.constant 0 : i32
    %c0_i32_0 = arith.constant 0 : i32
    %c0_i32_1 = arith.constant 0 : i32
    return %c0_i32, %c0_i32_0 : i32, i32
  }
  func.func @transform_3(%arg0: i32) -> (i32, i32) {
    %c0_i32 = arith.constant 0 : i32
    %c0_i32_0 = arith.constant 0 : i32
    return %arg0, %c0_i32 : i32, i32
  }
}

module attributes {stable_mosaic.version = 11 : i64} {
  func.func @_matmul_kernel_1k(%arg0: i32, %arg1: memref<16x128xbf16, #tpu.memory_space<vmem>>, %arg2: memref<128x512xbf16, #tpu.memory_space<vmem>>, %arg3: memref<1x512xf32, #tpu.memory_space<vmem>>, %arg4: memref<16x512xbf16, #tpu.memory_space<vmem>>) attributes {dimension_semantics = [#tpu.dimension_semantics<parallel>], iteration_bounds = array<i64: 1>, scalar_prefetch = 0 : i64, scratch_operands = 0 : i64, tpu.core_type = #tpu.core_type<tc>, window_params = [{transform_indices = @transform_0, window_bounds = array<i64: 16, 128>}, {pipeline_mode = #tpu.pipeline_mode<synchronous>, transform_indices = @transform_1, window_bounds = array<i64: 128, 512>}, {pipeline_mode = #tpu.pipeline_mode<synchronous>, transform_indices = @transform_2, window_bounds = array<i64: 1, 512>}, {transform_indices = @transform_3, window_bounds = array<i64: 16, 512>}]} {
    %c0 = arith.constant 0 : index
    %c0_0 = arith.constant 0 : index
    %0 = vector.load %arg1[%c0, %c0_0] : memref<16x128xbf16, #tpu.memory_space<vmem>>, vector<16x128xbf16>
    %c0_1 = arith.constant 0 : index
    %c0_2 = arith.constant 0 : index
    %1 = vector.load %arg2[%c0_1, %c0_2] : memref<128x512xbf16, #tpu.memory_space<vmem>>, vector<128x512xbf16>
    %cst = arith.constant dense<0.000000e+00> : vector<16x512xf32>
    %2 = tpu.matmul %0, %1, %cst {dimension_numbers = #tpu.dot_dimension_numbers<[1], [0], [0], [1], [0, 0, 1, 1], [], []>} : vector<16x128xbf16>, vector<128x512xbf16>, vector<16x512xf32> -> vector<16x512xf32>
    %c0_3 = arith.constant 0 : index
    %c0_4 = arith.constant 0 : index
    %3 = vector.load %arg3[%c0_3, %c0_4] : memref<1x512xf32, #tpu.memory_space<vmem>>, vector<1x512xf32>
    %4 = vector.broadcast %3 : vector<1x512xf32> to vector<16x512xf32>
    %5 = arith.addf %2, %4 : vector<16x512xf32>
    %cst_5 = arith.constant 0.000000e+00 : f32
    %6 = vector.broadcast %cst_5 : f32 to vector<16x512xf32>
    %7 = arith.maximumf %5, %6 : vector<16x512xf32>
    %8 = arith.truncf %7 : vector<16x512xf32> to vector<16x512xbf16>
    %c0_6 = arith.constant 0 : index
    %c0_7 = arith.constant 0 : index
    %9 = vector.load %arg4[%c0_6, %c0_7] : memref<16x512xbf16, #tpu.memory_space<vmem>>, vector<16x512xbf16>
    tpu.vector_store %arg4[%c0_6, %c0_7], %8 {strides = array<i32>} : memref<16x512xbf16, #tpu.memory_space<vmem>>, vector<16x512xbf16>,
    return
  }
  func.func @transform_0(%arg0: i32) -> (i32, i32) {
    %c0_i32 = arith.constant 0 : i32
    %c0_i32_0 = arith.constant 0 : i32
    return %arg0, %c0_i32 : i32, i32
  }
  func.func @transform_1(%arg0: i32) -> (i32, i32) {
    %c0_i32 = arith.constant 0 : i32
    %c0_i32_0 = arith.constant 0 : i32
    %c0_i32_1 = arith.constant 0 : i32
    return %c0_i32, %c0_i32_0 : i32, i32
  }
  func.func @transform_2(%arg0: i32) -> (i32, i32) {
    %c0_i32 = arith.constant 0 : i32
    %c0_i32_0 = arith.constant 0 : i32
    %c0_i32_1 = arith.constant 0 : i32
    return %c0_i32, %c0_i32_0 : i32, i32
  }
  func.func @transform_3(%arg0: i32) -> (i32, i32) {
    %c0_i32 = arith.constant 0 : i32
    %c0_i32_0 = arith.constant 0 : i32
    return %arg0, %c0_i32 : i32, i32
  }
}

module attributes {stable_mosaic.version = 11 : i64} {
  func.func @_matmul_kernel_1k(%arg0: i32, %arg1: memref<16x640xbf16, #tpu.memory_space<vmem>>, %arg2: memref<640x128xbf16, #tpu.memory_space<vmem>>, %arg3: memref<1x128xf32, #tpu.memory_space<vmem>>, %arg4: memref<16x128xbf16, #tpu.memory_space<vmem>>) attributes {dimension_semantics = [#tpu.dimension_semantics<parallel>], iteration_bounds = array<i64: 1>, scalar_prefetch = 0 : i64, scratch_operands = 0 : i64, tpu.core_type = #tpu.core_type<tc>, window_params = [{transform_indices = @transform_0, window_bounds = array<i64: 16, 640>}, {pipeline_mode = #tpu.pipeline_mode<synchronous>, transform_indices = @transform_1, window_bounds = array<i64: 640, 128>}, {pipeline_mode = #tpu.pipeline_mode<synchronous>, transform_indices = @transform_2, window_bounds = array<i64: 1, 128>}, {transform_indices = @transform_3, window_bounds = array<i64: 16, 128>}]} {
    %c0 = arith.constant 0 : index
    %c0_0 = arith.constant 0 : index
    %0 = vector.load %arg1[%c0, %c0_0] : memref<16x640xbf16, #tpu.memory_space<vmem>>, vector<16x640xbf16>
    %c0_1 = arith.constant 0 : index
    %c0_2 = arith.constant 0 : index
    %1 = vector.load %arg2[%c0_1, %c0_2] : memref<640x128xbf16, #tpu.memory_space<vmem>>, vector<640x128xbf16>
    %cst = arith.constant dense<0.000000e+00> : vector<16x128xf32>
    %2 = tpu.matmul %0, %1, %cst {dimension_numbers = #tpu.dot_dimension_numbers<[1], [0], [0], [1], [0, 0, 1, 1], [], []>} : vector<16x640xbf16>, vector<640x128xbf16>, vector<16x128xf32> -> vector<16x128xf32>
    %c0_3 = arith.constant 0 : index
    %c0_4 = arith.constant 0 : index
    %3 = vector.load %arg3[%c0_3, %c0_4] : memref<1x128xf32, #tpu.memory_space<vmem>>, vector<1x128xf32>
    %4 = vector.broadcast %3 : vector<1x128xf32> to vector<16x128xf32>
    %5 = arith.addf %2, %4 : vector<16x128xf32>
    %cst_5 = arith.constant 0.000000e+00 : f32
    %6 = vector.broadcast %cst_5 : f32 to vector<16x128xf32>
    %7 = arith.maximumf %5, %6 : vector<16x128xf32>
    %8 = arith.truncf %7 : vector<16x128xf32> to vector<16x128xbf16>
    %c0_6 = arith.constant 0 : index
    %c0_7 = arith.constant 0 : index
    %9 = vector.load %arg4[%c0_6, %c0_7] : memref<16x128xbf16, #tpu.memory_space<vmem>>, vector<16x128xbf16>
    tpu.vector_store %arg4[%c0_6, %c0_7], %8 {strides = array<i32>} : memref<16x128xbf16, #tpu.memory_space<vmem>>, vector<16x128xbf16>,
    return
  }
  func.func @transform_0(%arg0: i32) -> (i32, i32) {
    %c0_i32 = arith.constant 0 : i32
    %c0_i32_0 = arith.constant 0 : i32
    return %arg0, %c0_i32 : i32, i32
  }
  func.func @transform_1(%arg0: i32) -> (i32, i32) {
    %c0_i32 = arith.constant 0 : i32
    %c0_i32_0 = arith.constant 0 : i32
    %c0_i32_1 = arith.constant 0 : i32
    return %c0_i32, %c0_i32_0 : i32, i32
  }
  func.func @transform_2(%arg0: i32) -> (i32, i32) {
    %c0_i32 = arith.constant 0 : i32
    %c0_i32_0 = arith.constant 0 : i32
    %c0_i32_1 = arith.constant 0 : i32
    return %c0_i32, %c0_i32_0 : i32, i32
  }
  func.func @transform_3(%arg0: i32) -> (i32, i32) {
    %c0_i32 = arith.constant 0 : i32
    %c0_i32_0 = arith.constant 0 : i32
    return %arg0, %c0_i32 : i32, i32
  }
}

module attributes {stable_mosaic.version = 11 : i64} {
  func.func @_matmul_kernel_1k(%arg0: i32, %arg1: memref<16x512xbf16, #tpu.memory_space<vmem>>, %arg2: memref<512x128xbf16, #tpu.memory_space<vmem>>, %arg3: memref<1x128xf32, #tpu.memory_space<vmem>>, %arg4: memref<16x128xf32, #tpu.memory_space<vmem>>) attributes {dimension_semantics = [#tpu.dimension_semantics<parallel>], iteration_bounds = array<i64: 1>, scalar_prefetch = 0 : i64, scratch_operands = 0 : i64, tpu.core_type = #tpu.core_type<tc>, window_params = [{transform_indices = @transform_0, window_bounds = array<i64: 16, 512>}, {pipeline_mode = #tpu.pipeline_mode<synchronous>, transform_indices = @transform_1, window_bounds = array<i64: 512, 128>}, {pipeline_mode = #tpu.pipeline_mode<synchronous>, transform_indices = @transform_2, window_bounds = array<i64: 1, 128>}, {transform_indices = @transform_3, window_bounds = array<i64: 16, 128>}]} {
    %c0 = arith.constant 0 : index
    %c0_0 = arith.constant 0 : index
    %0 = vector.load %arg1[%c0, %c0_0] : memref<16x512xbf16, #tpu.memory_space<vmem>>, vector<16x512xbf16>
    %c0_1 = arith.constant 0 : index
    %c0_2 = arith.constant 0 : index
    %1 = vector.load %arg2[%c0_1, %c0_2] : memref<512x128xbf16, #tpu.memory_space<vmem>>, vector<512x128xbf16>
    %cst = arith.constant dense<0.000000e+00> : vector<16x128xf32>
    %2 = tpu.matmul %0, %1, %cst {dimension_numbers = #tpu.dot_dimension_numbers<[1], [0], [0], [1], [0, 0, 1, 1], [], []>} : vector<16x512xbf16>, vector<512x128xbf16>, vector<16x128xf32> -> vector<16x128xf32>
    %c0_3 = arith.constant 0 : index
    %c0_4 = arith.constant 0 : index
    %3 = vector.load %arg3[%c0_3, %c0_4] : memref<1x128xf32, #tpu.memory_space<vmem>>, vector<1x128xf32>
    %4 = vector.broadcast %3 : vector<1x128xf32> to vector<16x128xf32>
    %5 = arith.addf %2, %4 : vector<16x128xf32>
    %c0_5 = arith.constant 0 : index
    %c0_6 = arith.constant 0 : index
    %6 = vector.load %arg4[%c0_5, %c0_6] : memref<16x128xf32, #tpu.memory_space<vmem>>, vector<16x128xf32>
    tpu.vector_store %arg4[%c0_5, %c0_6], %5 {strides = array<i32>} : memref<16x128xf32, #tpu.memory_space<vmem>>, vector<16x128xf32>,
    return
  }
  func.func @transform_0(%arg0: i32) -> (i32, i32) {
    %c0_i32 = arith.constant 0 : i32
    %c0_i32_0 = arith.constant 0 : i32
    return %arg0, %c0_i32 : i32, i32
  }
  func.func @transform_1(%arg0: i32) -> (i32, i32) {
    %c0_i32 = arith.constant 0 : i32
    %c0_i32_0 = arith.constant 0 : i32
    %c0_i32_1 = arith.constant 0 : i32
    return %c0_i32, %c0_i32_0 : i32, i32
  }
  func.func @transform_2(%arg0: i32) -> (i32, i32) {
    %c0_i32 = arith.constant 0 : i32
    %c0_i32_0 = arith.constant 0 : i32
    %c0_i32_1 = arith.constant 0 : i32
    return %c0_i32, %c0_i32_0 : i32, i32
  }
  func.func @transform_3(%arg0: i32) -> (i32, i32) {
    %c0_i32 = arith.constant 0 : i32
    %c0_i32_0 = arith.constant 0 : i32
    return %arg0, %c0_i32 : i32, i32
  }
}

module attributes {stable_mosaic.version = 11 : i64} {
  func.func @_log_softmax_kernel(%arg0: memref<2x6x4xf32, #tpu.memory_space<vmem>>, %arg1: memref<2x6x4xf32, #tpu.memory_space<vmem>>) attributes {dimension_semantics = [], scalar_prefetch = 0 : i64, scratch_operands = 0 : i64, tpu.core_type = #tpu.core_type<tc>} {
    %c0 = arith.constant 0 : index
    %c0_0 = arith.constant 0 : index
    %c0_1 = arith.constant 0 : index
    %0 = vector.load %arg0[%c0, %c0_0, %c0_1] : memref<2x6x4xf32, #tpu.memory_space<vmem>>, vector<2x6x4xf32>
    %cst = arith.constant dense<0xFF800000> : vector<2x6xf32>
    %1 = vector.multi_reduction <maximumf>, %0, %cst [2] : vector<2x6x4xf32> to vector<2x6xf32>
    %2 = vector.shape_cast %1 : vector<2x6xf32> to vector<2x6x1xf32>
    %3 = vector.broadcast %2 : vector<2x6x1xf32> to vector<2x6x4xf32>
    %4 = arith.subf %0, %3 : vector<2x6x4xf32>
    %5 = math.exp %4 : vector<2x6x4xf32>
    %cst_2 = arith.constant dense<0.000000e+00> : vector<2x6xf32>
    %6 = vector.multi_reduction <add>, %5, %cst_2 [2] : vector<2x6x4xf32> to vector<2x6xf32>
    %7 = vector.shape_cast %6 : vector<2x6xf32> to vector<2x6x1xf32>
    %8 = math.log %7 : vector<2x6x1xf32>
    %9 = vector.broadcast %8 : vector<2x6x1xf32> to vector<2x6x4xf32>
    %10 = arith.subf %4, %9 : vector<2x6x4xf32>
    %c0_3 = arith.constant 0 : index
    %c0_4 = arith.constant 0 : index
    %c0_5 = arith.constant 0 : index
    %11 = vector.load %arg1[%c0_3, %c0_4, %c0_5] : memref<2x6x4xf32, #tpu.memory_space<vmem>>, vector<2x6x4xf32>
    tpu.vector_store %arg1[%c0_3, %c0_4, %c0_5], %10 {strides = array<i32>} : memref<2x6x4xf32, #tpu.memory_space<vmem>>, vector<2x6x4xf32>,
    return
  }
}

</mosaic_0001>

<llo_original>
// kernel: cnn_forward.6
$region0: #{cnn_forward.6}
  #allocation0 [shape = 'u32[]', space=smem, size = 0x4, offset = 0x4, fixed_abs, tag = 'smem constant byte address 0x4 - core index']
  #allocation1 [shape = 'u32[72,128]{1,0:T(1,128)}', space=vmem, size = 0x9000, scoped, tag = 'internal scratch']
  %s0 = inlined_call_operand.vmem [shape: bf16[128,256], index: 0, kind: input, shape index: {}]
  %s1 = inlined_call_operand.vmem [shape: bf16[256,128], index: 1, kind: input, shape index: {}]
  %s2 = inlined_call_operand.vmem [shape: f32[1,128], index: 2, kind: input, shape index: {}]
  %s3 = inlined_call_operand.vmem [shape: bf16[128,128], index: 3, kind: output, shape index: {}]
  %s4 = sld [smem:[#allocation0]]
  $region22: #{cnn_forward.6} parent=0
    _
  %s6 = ssub.s32 1, %s4
  %s7 = scalar_select 0, %s6, %s4
  // Predicated region
  $region2: #{cnn_forward.6} parent=0 // pred_check
    _
  $region3: #{cnn_forward.6} parent=0 // pred_check_branch
    %9 = sbr.rel (0) target = $region5
  $region4: #{cnn_forward.6} parent=0 // pred_region
    _
  $region5: #{cnn_forward.6} parent=0 // pred_fallthru
    _
  // Predicated region
  $region6: #{cnn_forward.6} parent=0 // pred_check
    _
  $region7: #{cnn_forward.6} parent=0 // pred_check_branch
    %11 = sbr.rel (0) target = $region9
  $region8: #{cnn_forward.6} parent=0 // pred_region
    _
  $region9: #{cnn_forward.6} parent=0 // pred_fallthru
    _
  // Predicated region
  $region10: #{cnn_forward.6} parent=0 // pred_check
    _
  $region11: #{cnn_forward.6} parent=0 // pred_check_branch
    %13 = sbr.rel (0) target = $region13
  $region12: #{cnn_forward.6} parent=0 // pred_region
    _
  $region13: #{cnn_forward.6} parent=0 // pred_fallthru
    _
  %v14 = vld [vmem:[%s0] sm:$0xff]
  %v15 = vld [vmem:[%s0 + $0x8] sm:$0xff]
  %v16 = vld [vmem:[%s0 + $0x10] sm:$0xff]
  %v17 = vld [vmem:[%s0 + $0x18] sm:$0xff]
  %v18 = vld [vmem:[%s0 + $0x20] sm:$0xff]
  %v19 = vld [vmem:[%s0 + $0x28] sm:$0xff]
  %v20 = vld [vmem:[%s0 + $0x30] sm:$0xff]
  %v21 = vld [vmem:[%s0 + $0x38] sm:$0xff]
  %v22 = vld [vmem:[%s0 + $0x40] sm:$0xff]
  %v23 = vld [vmem:[%s0 + $0x48] sm:$0xff]
  %v24 = vld [vmem:[%s0 + $0x50] sm:$0xff]
  %v25 = vld [vmem:[%s0 + $0x58] sm:$0xff]
  %v26 = vld [vmem:[%s0 + $0x60] sm:$0xff]
  %v27 = vld [vmem:[%s0 + $0x68] sm:$0xff]
  %v28 = vld [vmem:[%s0 + $0x70] sm:$0xff]
  %v29 = vld [vmem:[%s0 + $0x78] sm:$0xff]
  %v30 = vld [vmem:[%s1] sm:$0xf]
  %v31 = vld [vmem:[%s1 + $0x4] sm:$0xf]
  %v32 = vld [vmem:[%s1 + $0x8] sm:$0xf]
  %v33 = vld [vmem:[%s1 + $0xc] sm:$0xf]
  %v34 = vld [vmem:[%s1 + $0x10] sm:$0xf]
  %v35 = vld [vmem:[%s1 + $0x14] sm:$0xf]
  %v36 = vld [vmem:[%s1 + $0x18] sm:$0xf]
  %v37 = vld [vmem:[%s1 + $0x1c] sm:$0xf]
  %v38 = vld [vmem:[%s1 + $0x20] sm:$0xf]
  %v39 = vld [vmem:[%s1 + $0x24] sm:$0xf]
  %v40 = vld [vmem:[%s1 + $0x28] sm:$0xf]
  %v41 = vld [vmem:[%s1 + $0x2c] sm:$0xf]
  %v42 = vld [vmem:[%s1 + $0x30] sm:$0xf]
  %v43 = vld [vmem:[%s1 + $0x34] sm:$0xf]
  %v44 = vld [vmem:[%s1 + $0x38] sm:$0xf]
  %v45 = vld [vmem:[%s1 + $0x3c] sm:$0xf]
  %v46 = vld [vmem:[%s1 + $0x40] sm:$0xf]
  %v47 = vld [vmem:[%s1 + $0x44] sm:$0xf]
  %v48 = vld [vmem:[%s1 + $0x48] sm:$0xf]
  %v49 = vld [vmem:[%s1 + $0x4c] sm:$0xf]
  %v50 = vld [vmem:[%s1 + $0x50] sm:$0xf]
  %v51 = vld [vmem:[%s1 + $0x54] sm:$0xf]
  %v52 = vld [vmem:[%s1 + $0x58] sm:$0xf]
  %v53 = vld [vmem:[%s1 + $0x5c] sm:$0xf]
  %v54 = vld [vmem:[%s1 + $0x60] sm:$0xf]
  %v55 = vld [vmem:[%s1 + $0x64] sm:$0xf]
  %v56 = vld [vmem:[%s1 + $0x68] sm:$0xf]
  %v57 = vld [vmem:[%s1 + $0x6c] sm:$0xf]
  %v58 = vld [vmem:[%s1 + $0x70] sm:$0xf]
  %v59 = vld [vmem:[%s1 + $0x74] sm:$0xf]
  %v60 = vld [vmem:[%s1 + $0x78] sm:$0xf]
  %v61 = vld [vmem:[%s1 + $0x7c] sm:$0xf]
  %v62 = vld [vmem:[%s2] sm:$0x1]
  %v64 = vperm.slane %v62, 0
  %v82 = vunpack.c.l.b16 %v14
  %v83 = vunpack.c.h.b16 %v14
  %v84 = vunpack.c.l.b16 %v15
  %v85 = vunpack.c.h.b16 %v15
  %v86 = vunpack.c.l.b16 %v16
  %v87 = vunpack.c.h.b16 %v16
  %v88 = vunpack.c.l.b16 %v17
  %v89 = vunpack.c.h.b16 %v17
  %v90 = vunpack.c.l.b16 %v18
  %v91 = vunpack.c.h.b16 %v18
  %v92 = vunpack.c.l.b16 %v19
  %v93 = vunpack.c.h.b16 %v19
  %v94 = vunpack.c.l.b16 %v20
  %v95 = vunpack.c.h.b16 %v20
  %v96 = vunpack.c.l.b16 %v21
  %v97 = vunpack.c.h.b16 %v21
  %v98 = vunpack.c.l.b16 %v22
  %v99 = vunpack.c.h.b16 %v22
  %v100 = vunpack.c.l.b16 %v23
  %v101 = vunpack.c.h.b16 %v23
  %v102 = vunpack.c.l.b16 %v24
  %v103 = vunpack.c.h.b16 %v24
  %v104 = vunpack.c.l.b16 %v25
  %v105 = vunpack.c.h.b16 %v25
  %v106 = vunpack.c.l.b16 %v26
  %v107 = vunpack.c.h.b16 %v26
  %v108 = vunpack.c.l.b16 %v27
  %v109 = vunpack.c.h.b16 %v27
  %v110 = vunpack.c.l.b16 %v28
  %v111 = vunpack.c.h.b16 %v28
  %v112 = vunpack.c.l.b16 %v29
  %v113 = vunpack.c.h.b16 %v29
  %v114 = vpack.c.b16 %v84, %v82
  %v115 = vpack.c.b16 %v85, %v83
  %v116 = vpack.c.b16 %v88, %v86
  %v117 = vpack.c.b16 %v89, %v87
  %v118 = vpack.c.b16 %v92, %v90
  %v119 = vpack.c.b16 %v93, %v91
  %v120 = vpack.c.b16 %v96, %v94
  %v121 = vpack.c.b16 %v97, %v95
  %v122 = vpack.c.b16 %v100, %v98
  %v123 = vpack.c.b16 %v101, %v99
  %v124 = vpack.c.b16 %v104, %v102
  %v125 = vpack.c.b16 %v105, %v103
  %v126 = vpack.c.b16 %v108, %v106
  %v127 = vpack.c.b16 %v109, %v107
  %v128 = vpack.c.b16 %v112, %v110
  %v129 = vpack.c.b16 %v113, %v111
  %v178 = vunpack.c.l.b16 %v30
  %v179 = vunpack.c.l.b16 %v31
  %v180 = vunpack.c.l.b16 %v32
  %v181 = vunpack.c.l.b16 %v33
  %v182 = vunpack.c.l.b16 %v34
  %v183 = vunpack.c.l.b16 %v35
  %v184 = vunpack.c.l.b16 %v36
  %v185 = vunpack.c.l.b16 %v37
  %v186 = vunpack.c.l.b16 %v38
  %v187 = vunpack.c.l.b16 %v39
  %v188 = vunpack.c.l.b16 %v40
  %v189 = vunpack.c.l.b16 %v41
  %v190 = vunpack.c.l.b16 %v42
  %v191 = vunpack.c.l.b16 %v43
  %v192 = vunpack.c.l.b16 %v44
  %v193 = vunpack.c.l.b16 %v45
  %v194 = vunpack.c.l.b16 %v46
  %v195 = vunpack.c.l.b16 %v47
  %v196 = vunpack.c.l.b16 %v48
  %v197 = vunpack.c.l.b16 %v49
  %v198 = vunpack.c.l.b16 %v50
  %v199 = vunpack.c.l.b16 %v51
  %v200 = vunpack.c.l.b16 %v52
  %v201 = vunpack.c.l.b16 %v53
  %v202 = vunpack.c.l.b16 %v54
  %v203 = vunpack.c.l.b16 %v55
  %v204 = vunpack.c.l.b16 %v56
  %v205 = vunpack.c.l.b16 %v57
  %v206 = vunpack.c.l.b16 %v58
  %v207 = vunpack.c.l.b16 %v59
  %v208 = vunpack.c.l.b16 %v60
  %v209 = vunpack.c.l.b16 %v61
  %v210 = vpack.c.b16 %v179, %v178
  %v211 = vpack.c.b16 %v181, %v180
  %v212 = vpack.c.b16 %v183, %v182
  %v213 = vpack.c.b16 %v185, %v184
  %v214 = vpack.c.b16 %v187, %v186
  %v215 = vpack.c.b16 %v189, %v188
  %v216 = vpack.c.b16 %v191, %v190
  %v217 = vpack.c.b16 %v193, %v192
  %v218 = vpack.c.b16 %v195, %v194
  %v219 = vpack.c.b16 %v197, %v196
  %v220 = vpack.c.b16 %v199, %v198
  %v221 = vpack.c.b16 %v201, %v200
  %v222 = vpack.c.b16 %v203, %v202
  %v223 = vpack.c.b16 %v205, %v204
  %v224 = vpack.c.b16 %v207, %v206
  %v225 = vpack.c.b16 %v209, %v208
  %242 = vmatpush.bf16.msra.mxu0 %v217
  %243 = vmatpush.bf16.msra.mxu0 %v216
  %244 = vmatpush.bf16.msra.mxu0 %v215
  %245 = vmatpush.bf16.msra.mxu0 %v214
  %246 = vmatpush.bf16.msra.mxu0 %v213
  %247 = vmatpush.bf16.msra.mxu0 %v212
  %248 = vmatpush.bf16.msra.mxu0 %v211
  %249 = vmatpush.bf16.msra.mxu0 %v210
  %250 = vmatmul.bf16.gmra.mxu0 %v114
  %v251 = vpop.f32.mrf.mxu0
  %v252 = vadd.f32 %v64, %v251
  %v253 = vpop.f32.mrf.mxu0
  %v254 = vadd.f32 %v64, %v253
  %255 = vmatmul.bf16.gmra.mxu0 %v116
  %v256 = vpop.f32.mrf.mxu0
  %v257 = vadd.f32 %v64, %v256
  %v258 = vpop.f32.mrf.mxu0
  %v259 = vadd.f32 %v64, %v258
  %260 = vmatmul.bf16.gmra.mxu0 %v118
  %v261 = vpop.f32.mrf.mxu0
  %v262 = vadd.f32 %v64, %v261
  %v263 = vpop.f32.mrf.mxu0
  %v264 = vadd.f32 %v64, %v263
  %265 = vmatmul.bf16.gmra.mxu0 %v120
  %v266 = vpop.f32.mrf.mxu0
  %v267 = vadd.f32 %v64, %v266
  %v268 = vpop.f32.mrf.mxu0
  %v269 = vadd.f32 %v64, %v268
  %270 = vmatmul.bf16.gmra.mxu0 %v122
  %v271 = vpop.f32.mrf.mxu0
  %v272 = vadd.f32 %v64, %v271
  %v273 = vpop.f32.mrf.mxu0
  %v274 = vadd.f32 %v64, %v273
  %275 = vmatmul.bf16.gmra.mxu0 %v124
  %v276 = vpop.f32.mrf.mxu0
  %v277 = vadd.f32 %v64, %v276
  %v278 = vpop.f32.mrf.mxu0
  %v279 = vadd.f32 %v64, %v278
  %280 = vmatmul.bf16.gmra.mxu0 %v126
  %v281 = vpop.f32.mrf.mxu0
  %v282 = vadd.f32 %v64, %v281
  %v283 = vpop.f32.mrf.mxu0
  %v284 = vadd.f32 %v64, %v283
  %285 = vmatmul.bf16.gmra.mxu0 %v128
  %v286 = vpop.f32.mrf.mxu0
  %v287 = vadd.f32 %v64, %v286
  %v288 = vpop.f32.mrf.mxu0
  %v289 = vadd.f32 %v64, %v288
  %290 = vdwg.mxu0
  %291 = vmatpush.bf16.msra.mxu0 %v225
  %292 = vmatpush.bf16.msra.mxu0 %v224
  %293 = vmatpush.bf16.msra.mxu0 %v223
  %294 = vmatpush.bf16.msra.mxu0 %v222
  %295 = vmatpush.bf16.msra.mxu0 %v221
  %296 = vmatpush.bf16.msra.mxu0 %v220
  %297 = vmatpush.bf16.msra.mxu0 %v219
  %298 = vmatpush.bf16.msra.mxu0 %v218
  %299 = vmatmul.bf16.gmra.mxu0 %v115
  %v300 = vpop.f32.mrf.mxu0
  %v301 = vadd.f32 %v252, %v300
  %v302 = vpop.f32.mrf.mxu0
  %v303 = vadd.f32 %v254, %v302
  %304 = vmatmul.bf16.gmra.mxu0 %v117
  %v305 = vpop.f32.mrf.mxu0
  %v306 = vadd.f32 %v257, %v305
  %v307 = vpop.f32.mrf.mxu0
  %v308 = vadd.f32 %v259, %v307
  %309 = vmatmul.bf16.gmra.mxu0 %v119
  %v310 = vpop.f32.mrf.mxu0
  %v311 = vadd.f32 %v262, %v310
  %v312 = vpop.f32.mrf.mxu0
  %v313 = vadd.f32 %v264, %v312
  %314 = vmatmul.bf16.gmra.mxu0 %v121
  %v315 = vpop.f32.mrf.mxu0
  %v316 = vadd.f32 %v267, %v315
  %v317 = vpop.f32.mrf.mxu0
  %v318 = vadd.f32 %v269, %v317
  %319 = vmatmul.bf16.gmra.mxu0 %v123
  %v320 = vpop.f32.mrf.mxu0
  %v321 = vadd.f32 %v272, %v320
  %v322 = vpop.f32.mrf.mxu0
  %v323 = vadd.f32 %v274, %v322
  %324 = vmatmul.bf16.gmra.mxu0 %v125
  %v325 = vpop.f32.mrf.mxu0
  %v326 = vadd.f32 %v277, %v325
  %v327 = vpop.f32.mrf.mxu0
  %v328 = vadd.f32 %v279, %v327
  %329 = vmatmul.bf16.gmra.mxu0 %v127
  %v330 = vpop.f32.mrf.mxu0
  %v331 = vadd.f32 %v282, %v330
  %v332 = vpop.f32.mrf.mxu0
  %v333 = vadd.f32 %v284, %v332
  %334 = vmatmul.bf16.gmra.mxu0 %v129
  %v335 = vpop.f32.mrf.mxu0
  %v336 = vadd.f32 %v287, %v335
  %v337 = vpop.f32.mrf.mxu0
  %v338 = vadd.f32 %v289, %v337
  %339 = vdwg.mxu0
  %v340 = vmax.f32 %v301, 0.0
  %v341 = vmax.f32 %v303, 0.0
  %v342 = vmax.f32 %v306, 0.0
  %v343 = vmax.f32 %v308, 0.0
  %v344 = vmax.f32 %v311, 0.0
  %v345 = vmax.f32 %v313, 0.0
  %v346 = vmax.f32 %v316, 0.0
  %v347 = vmax.f32 %v318, 0.0
  %v348 = vmax.f32 %v321, 0.0
  %v349 = vmax.f32 %v323, 0.0
  %v350 = vmax.f32 %v326, 0.0
  %v351 = vmax.f32 %v328, 0.0
  %v352 = vmax.f32 %v331, 0.0
  %v353 = vmax.f32 %v333, 0.0
  %v354 = vmax.f32 %v336, 0.0
  %v355 = vmax.f32 %v338, 0.0
  %v356 = vpack.c.bf16 %v340, %v340
  %v357 = vpack.c.bf16 %v341, %v341
  %v358 = vpack.c.bf16 %v342, %v342
  %v359 = vpack.c.bf16 %v343, %v343
  %v360 = vpack.c.bf16 %v344, %v344
  %v361 = vpack.c.bf16 %v345, %v345
  %v362 = vpack.c.bf16 %v346, %v346
  %v363 = vpack.c.bf16 %v347, %v347
  %v364 = vpack.c.bf16 %v348, %v348
  %v365 = vpack.c.bf16 %v349, %v349
  %v366 = vpack.c.bf16 %v350, %v350
  %v367 = vpack.c.bf16 %v351, %v351
  %v368 = vpack.c.bf16 %v352, %v352
  %v369 = vpack.c.bf16 %v353, %v353
  %v370 = vpack.c.bf16 %v354, %v354
  %v371 = vpack.c.bf16 %v355, %v355
  %372 = vst [vmem:[%s3] sm:$0xf] %v356
  %373 = vst [vmem:[%s3 + $0x4] sm:$0xf] %v357
  %374 = vst [vmem:[%s3 + $0x8] sm:$0xf] %v358
  %375 = vst [vmem:[%s3 + $0xc] sm:$0xf] %v359
  %376 = vst [vmem:[%s3 + $0x10] sm:$0xf] %v360
  %377 = vst [vmem:[%s3 + $0x14] sm:$0xf] %v361
  %378 = vst [vmem:[%s3 + $0x18] sm:$0xf] %v362
  %379 = vst [vmem:[%s3 + $0x1c] sm:$0xf] %v363
  %380 = vst [vmem:[%s3 + $0x20] sm:$0xf] %v364
  %381 = vst [vmem:[%s3 + $0x24] sm:$0xf] %v365
  %382 = vst [vmem:[%s3 + $0x28] sm:$0xf] %v366
  %383 = vst [vmem:[%s3 + $0x2c] sm:$0xf] %v367
  %384 = vst [vmem:[%s3 + $0x30] sm:$0xf] %v368
  %385 = vst [vmem:[%s3 + $0x34] sm:$0xf] %v369
  %386 = vst [vmem:[%s3 + $0x38] sm:$0xf] %v370
  %387 = vst [vmem:[%s3 + $0x3c] sm:$0xf] %v371
  // Predicated region
  $region14: #{cnn_forward.6} parent=0 // pred_check
    _
  $region15: #{cnn_forward.6} parent=0 // pred_check_branch
    %389 = sbr.rel (0) target = $region17
  $region16: #{cnn_forward.6} parent=0 // pred_region
    _
  $region17: #{cnn_forward.6} parent=0 // pred_fallthru
    _
  // Predicated region
  $region18: #{cnn_forward.6} parent=0 // pred_check
    _
  $region19: #{cnn_forward.6} parent=0 // pred_check_branch
    %391 = sbr.rel (0) target = $region21
  $region20: #{cnn_forward.6} parent=0 // pred_region
    _
  $region21: #{cnn_forward.6} parent=0 // pred_fallthru
    _

// kernel: cnn_forward.7
$region0: #{cnn_forward.7}
  #allocation0 [shape = 'u32[]', space=smem, size = 0x4, offset = 0x4, fixed_abs, tag = 'smem constant byte address 0x4 - core index']
  #allocation1 [shape = 'u32[72,128]{1,0:T(1,128)}', space=vmem, size = 0x9000, scoped, tag = 'internal scratch']
  %s0 = inlined_call_operand.vmem [shape: bf16[32,512], index: 0, kind: input, shape index: {}]
  %s1 = inlined_call_operand.vmem [shape: bf16[512,128], index: 1, kind: input, shape index: {}]
  %s2 = inlined_call_operand.vmem [shape: f32[1,128], index: 2, kind: input, shape index: {}]
  %s3 = inlined_call_operand.vmem [shape: bf16[32,128], index: 3, kind: output, shape index: {}]
  %s4 = sld [smem:[#allocation0]]
  $region22: #{cnn_forward.7} parent=0
    _
  %s6 = ssub.s32 1, %s4
  %s7 = scalar_select 0, %s6, %s4
  // Predicated region
  $region2: #{cnn_forward.7} parent=0 // pred_check
    _
  $region3: #{cnn_forward.7} parent=0 // pred_check_branch
    %9 = sbr.rel (0) target = $region5
  $region4: #{cnn_forward.7} parent=0 // pred_region
    _
  $region5: #{cnn_forward.7} parent=0 // pred_fallthru
    _
  // Predicated region
  $region6: #{cnn_forward.7} parent=0 // pred_check
    _
  $region7: #{cnn_forward.7} parent=0 // pred_check_branch
    %11 = sbr.rel (0) target = $region9
  $region8: #{cnn_forward.7} parent=0 // pred_region
    _
  $region9: #{cnn_forward.7} parent=0 // pred_fallthru
    _
  // Predicated region
  $region10: #{cnn_forward.7} parent=0 // pred_check
    _
  $region11: #{cnn_forward.7} parent=0 // pred_check_branch
    %13 = sbr.rel (0) target = $region13
  $region12: #{cnn_forward.7} parent=0 // pred_region
    _
  $region13: #{cnn_forward.7} parent=0 // pred_fallthru
    _
  %v14 = vld [vmem:[%s0] sm:$0xff]
  %v15 = vld [vmem:[%s0 + $0x8] sm:$0xff]
  %v16 = vld [vmem:[%s0 + $0x10] sm:$0xff]
  %v17 = vld [vmem:[%s0 + $0x18] sm:$0xff]
  %v18 = vld [vmem:[%s0 + $0x20] sm:$0xff]
  %v19 = vld [vmem:[%s0 + $0x28] sm:$0xff]
  %v20 = vld [vmem:[%s0 + $0x30] sm:$0xff]
  %v21 = vld [vmem:[%s0 + $0x38] sm:$0xff]
  %v22 = vld [vmem:[%s1] sm:$0xf]
  %v23 = vld [vmem:[%s1 + $0x4] sm:$0xf]
  %v24 = vld [vmem:[%s1 + $0x8] sm:$0xf]
  %v25 = vld [vmem:[%s1 + $0xc] sm:$0xf]
  %v26 = vld [vmem:[%s1 + $0x10] sm:$0xf]
  %v27 = vld [vmem:[%s1 + $0x14] sm:$0xf]
  %v28 = vld [vmem:[%s1 + $0x18] sm:$0xf]
  %v29 = vld [vmem:[%s1 + $0x1c] sm:$0xf]
  %v30 = vld [vmem:[%s1 + $0x20] sm:$0xf]
  %v31 = vld [vmem:[%s1 + $0x24] sm:$0xf]
  %v32 = vld [vmem:[%s1 + $0x28] sm:$0xf]
  %v33 = vld [vmem:[%s1 + $0x2c] sm:$0xf]
  %v34 = vld [vmem:[%s1 + $0x30] sm:$0xf]
  %v35 = vld [vmem:[%s1 + $0x34] sm:$0xf]
  %v36 = vld [vmem:[%s1 + $0x38] sm:$0xf]
  %v37 = vld [vmem:[%s1 + $0x3c] sm:$0xf]
  %v38 = vld [vmem:[%s1 + $0x40] sm:$0xf]
  %v39 = vld [vmem:[%s1 + $0x44] sm:$0xf]
  %v40 = vld [vmem:[%s1 + $0x48] sm:$0xf]
  %v41 = vld [vmem:[%s1 + $0x4c] sm:$0xf]
  %v42 = vld [vmem:[%s1 + $0x50] sm:$0xf]
  %v43 = vld [vmem:[%s1 + $0x54] sm:$0xf]
  %v44 = vld [vmem:[%s1 + $0x58] sm:$0xf]
  %v45 = vld [vmem:[%s1 + $0x5c] sm:$0xf]
  %v46 = vld [vmem:[%s1 + $0x60] sm:$0xf]
  %v47 = vld [vmem:[%s1 + $0x64] sm:$0xf]
  %v48 = vld [vmem:[%s1 + $0x68] sm:$0xf]
  %v49 = vld [vmem:[%s1 + $0x6c] sm:$0xf]
  %v50 = vld [vmem:[%s1 + $0x70] sm:$0xf]
  %v51 = vld [vmem:[%s1 + $0x74] sm:$0xf]
  %v52 = vld [vmem:[%s1 + $0x78] sm:$0xf]
  %v53 = vld [vmem:[%s1 + $0x7c] sm:$0xf]
  %v54 = vld [vmem:[%s1 + $0x80] sm:$0xf]
  %v55 = vld [vmem:[%s1 + $0x84] sm:$0xf]
  %v56 = vld [vmem:[%s1 + $0x88] sm:$0xf]
  %v57 = vld [vmem:[%s1 + $0x8c] sm:$0xf]
  %v58 = vld [vmem:[%s1 + $0x90] sm:$0xf]
  %v59 = vld [vmem:[%s1 + $0x94] sm:$0xf]
  %v60 = vld [vmem:[%s1 + $0x98] sm:$0xf]
  %v61 = vld [vmem:[%s1 + $0x9c] sm:$0xf]
  %v62 = vld [vmem:[%s1 + $0xa0] sm:$0xf]
  %v63 = vld [vmem:[%s1 + $0xa4] sm:$0xf]
  %v64 = vld [vmem:[%s1 + $0xa8] sm:$0xf]
  %v65 = vld [vmem:[%s1 + $0xac] sm:$0xf]
  %v66 = vld [vmem:[%s1 + $0xb0] sm:$0xf]
  %v67 = vld [vmem:[%s1 + $0xb4] sm:$0xf]
  %v68 = vld [vmem:[%s1 + $0xb8] sm:$0xf]
  %v69 = vld [vmem:[%s1 + $0xbc] sm:$0xf]
  %v70 = vld [vmem:[%s1 + $0xc0] sm:$0xf]
  %v71 = vld [vmem:[%s1 + $0xc4] sm:$0xf]
  %v72 = vld [vmem:[%s1 + $0xc8] sm:$0xf]
  %v73 = vld [vmem:[%s1 + $0xcc] sm:$0xf]
  %v74 = vld [vmem:[%s1 + $0xd0] sm:$0xf]
  %v75 = vld [vmem:[%s1 + $0xd4] sm:$0xf]
  %v76 = vld [vmem:[%s1 + $0xd8] sm:$0xf]
  %v77 = vld [vmem:[%s1 + $0xdc] sm:$0xf]
  %v78 = vld [vmem:[%s1 + $0xe0] sm:$0xf]
  %v79 = vld [vmem:[%s1 + $0xe4] sm:$0xf]
  %v80 = vld [vmem:[%s1 + $0xe8] sm:$0xf]
  %v81 = vld [vmem:[%s1 + $0xec] sm:$0xf]
  %v82 = vld [vmem:[%s1 + $0xf0] sm:$0xf]
  %v83 = vld [vmem:[%s1 + $0xf4] sm:$0xf]
  %v84 = vld [vmem:[%s1 + $0xf8] sm:$0xf]
  %v85 = vld [vmem:[%s1 + $0xfc] sm:$0xf]
  %v86 = vld [vmem:[%s2] sm:$0x1]
  %v88 = vperm.slane %v86, 0
  %v98 = vunpack.c.l.b16 %v14
  %v99 = vunpack.c.h.b16 %v14
  %v100 = vunpack.c.l.b16 %v15
  %v101 = vunpack.c.h.b16 %v15
  %v102 = vunpack.c.l.b16 %v16
  %v103 = vunpack.c.h.b16 %v16
  %v104 = vunpack.c.l.b16 %v17
  %v105 = vunpack.c.h.b16 %v17
  %v106 = vunpack.c.l.b16 %v18
  %v107 = vunpack.c.h.b16 %v18
  %v108 = vunpack.c.l.b16 %v19
  %v109 = vunpack.c.h.b16 %v19
  %v110 = vunpack.c.l.b16 %v20
  %v111 = vunpack.c.h.b16 %v20
  %v112 = vunpack.c.l.b16 %v21
  %v113 = vunpack.c.h.b16 %v21
  %v114 = vpack.c.b16 %v102, %v98
  %v115 = vpack.c.b16 %v103, %v99
  %v116 = vpack.c.b16 %v104, %v100
  %v117 = vpack.c.b16 %v105, %v101
  %v118 = vpack.c.b16 %v110, %v106
  %v119 = vpack.c.b16 %v111, %v107
  %v120 = vpack.c.b16 %v112, %v108
  %v121 = vpack.c.b16 %v113, %v109
  %v194 = vunpack.c.l.b16 %v22
  %v195 = vunpack.c.l.b16 %v23
  %v196 = vunpack.c.l.b16 %v24
  %v197 = vunpack.c.l.b16 %v25
  %v198 = vunpack.c.l.b16 %v26
  %v199 = vunpack.c.l.b16 %v27
  %v200 = vunpack.c.l.b16 %v28
  %v201 = vunpack.c.l.b16 %v29
  %v202 = vunpack.c.l.b16 %v30
  %v203 = vunpack.c.l.b16 %v31
  %v204 = vunpack.c.l.b16 %v32
  %v205 = vunpack.c.l.b16 %v33
  %v206 = vunpack.c.l.b16 %v34
  %v207 = vunpack.c.l.b16 %v35
  %v208 = vunpack.c.l.b16 %v36
  %v209 = vunpack.c.l.b16 %v37
  %v210 = vunpack.c.l.b16 %v38
  %v211 = vunpack.c.l.b16 %v39
  %v212 = vunpack.c.l.b16 %v40
  %v213 = vunpack.c.l.b16 %v41
  %v214 = vunpack.c.l.b16 %v42
  %v215 = vunpack.c.l.b16 %v43
  %v216 = vunpack.c.l.b16 %v44
  %v217 = vunpack.c.l.b16 %v45
  %v218 = vunpack.c.l.b16 %v46
  %v219 = vunpack.c.l.b16 %v47
  %v220 = vunpack.c.l.b16 %v48
  %v221 = vunpack.c.l.b16 %v49
  %v222 = vunpack.c.l.b16 %v50
  %v223 = vunpack.c.l.b16 %v51
  %v224 = vunpack.c.l.b16 %v52
  %v225 = vunpack.c.l.b16 %v53
  %v226 = vunpack.c.l.b16 %v54
  %v227 = vunpack.c.l.b16 %v55
  %v228 = vunpack.c.l.b16 %v56
  %v229 = vunpack.c.l.b16 %v57
  %v230 = vunpack.c.l.b16 %v58
  %v231 = vunpack.c.l.b16 %v59
  %v232 = vunpack.c.l.b16 %v60
  %v233 = vunpack.c.l.b16 %v61
  %v234 = vunpack.c.l.b16 %v62
  %v235 = vunpack.c.l.b16 %v63
  %v236 = vunpack.c.l.b16 %v64
  %v237 = vunpack.c.l.b16 %v65
  %v238 = vunpack.c.l.b16 %v66
  %v239 = vunpack.c.l.b16 %v67
  %v240 = vunpack.c.l.b16 %v68
  %v241 = vunpack.c.l.b16 %v69
  %v242 = vunpack.c.l.b16 %v70
  %v243 = vunpack.c.l.b16 %v71
  %v244 = vunpack.c.l.b16 %v72
  %v245 = vunpack.c.l.b16 %v73
  %v246 = vunpack.c.l.b16 %v74
  %v247 = vunpack.c.l.b16 %v75
  %v248 = vunpack.c.l.b16 %v76
  %v249 = vunpack.c.l.b16 %v77
  %v250 = vunpack.c.l.b16 %v78
  %v251 = vunpack.c.l.b16 %v79
  %v252 = vunpack.c.l.b16 %v80
  %v253 = vunpack.c.l.b16 %v81
  %v254 = vunpack.c.l.b16 %v82
  %v255 = vunpack.c.l.b16 %v83
  %v256 = vunpack.c.l.b16 %v84
  %v257 = vunpack.c.l.b16 %v85
  %v258 = vpack.c.b16 %v195, %v194
  %v259 = vpack.c.b16 %v197, %v196
  %v260 = vpack.c.b16 %v199, %v198
  %v261 = vpack.c.b16 %v201, %v200
  %v262 = vpack.c.b16 %v203, %v202
  %v263 = vpack.c.b16 %v205, %v204
  %v264 = vpack.c.b16 %v207, %v206
  %v265 = vpack.c.b16 %v209, %v208
  %v266 = vpack.c.b16 %v211, %v210
  %v267 = vpack.c.b16 %v213, %v212
  %v268 = vpack.c.b16 %v215, %v214
  %v269 = vpack.c.b16 %v217, %v216
  %v270 = vpack.c.b16 %v219, %v218
  %v271 = vpack.c.b16 %v221, %v220
  %v272 = vpack.c.b16 %v223, %v222
  %v273 = vpack.c.b16 %v225, %v224
  %v274 = vpack.c.b16 %v227, %v226
  %v275 = vpack.c.b16 %v229, %v228
  %v276 = vpack.c.b16 %v231, %v230
  %v277 = vpack.c.b16 %v233, %v232
  %v278 = vpack.c.b16 %v235, %v234
  %v279 = vpack.c.b16 %v237, %v236
  %v280 = vpack.c.b16 %v239, %v238
  %v281 = vpack.c.b16 %v241, %v240
  %v282 = vpack.c.b16 %v243, %v242
  %v283 = vpack.c.b16 %v245, %v244
  %v284 = vpack.c.b16 %v247, %v246
  %v285 = vpack.c.b16 %v249, %v248
  %v286 = vpack.c.b16 %v251, %v250
  %v287 = vpack.c.b16 %v253, %v252
  %v288 = vpack.c.b16 %v255, %v254
  %v289 = vpack.c.b16 %v257, %v256
  %322 = vmatpush.bf16.msra.mxu0 %v265
  %323 = vmatpush.bf16.msra.mxu0 %v264
  %324 = vmatpush.bf16.msra.mxu0 %v263
  %325 = vmatpush.bf16.msra.mxu0 %v262
  %326 = vmatpush.bf16.msra.mxu0 %v261
  %327 = vmatpush.bf16.msra.mxu0 %v260
  %328 = vmatpush.bf16.msra.mxu0 %v259
  %329 = vmatpush.bf16.msra.mxu0 %v258
  %330 = vmatmul.bf16.gmra.mxu0 %v114
  %v331 = vpop.f32.mrf.mxu0
  %v332 = vadd.f32 %v88, %v331
  %v333 = vpop.f32.mrf.mxu0
  %v334 = vadd.f32 %v88, %v333
  %335 = vmatmul.bf16.gmra.mxu0 %v118
  %v336 = vpop.f32.mrf.mxu0
  %v337 = vadd.f32 %v88, %v336
  %v338 = vpop.f32.mrf.mxu0
  %v339 = vadd.f32 %v88, %v338
  %340 = vdwg.mxu0
  %341 = vmatpush.bf16.msra.mxu0 %v273
  %342 = vmatpush.bf16.msra.mxu0 %v272
  %343 = vmatpush.bf16.msra.mxu0 %v271
  %344 = vmatpush.bf16.msra.mxu0 %v270
  %345 = vmatpush.bf16.msra.mxu0 %v269
  %346 = vmatpush.bf16.msra.mxu0 %v268
  %347 = vmatpush.bf16.msra.mxu0 %v267
  %348 = vmatpush.bf16.msra.mxu0 %v266
  %349 = vmatmul.bf16.gmra.mxu0 %v115
  %v350 = vpop.f32.mrf.mxu0
  %v351 = vadd.f32 %v332, %v350
  %v352 = vpop.f32.mrf.mxu0
  %v353 = vadd.f32 %v334, %v352
  %354 = vmatmul.bf16.gmra.mxu0 %v119
  %v355 = vpop.f32.mrf.mxu0
  %v356 = vadd.f32 %v337, %v355
  %v357 = vpop.f32.mrf.mxu0
  %v358 = vadd.f32 %v339, %v357
  %359 = vdwg.mxu0
  %360 = vmatpush.bf16.msra.mxu0 %v281
  %361 = vmatpush.bf16.msra.mxu0 %v280
  %362 = vmatpush.bf16.msra.mxu0 %v279
  %363 = vmatpush.bf16.msra.mxu0 %v278
  %364 = vmatpush.bf16.msra.mxu0 %v277
  %365 = vmatpush.bf16.msra.mxu0 %v276
  %366 = vmatpush.bf16.msra.mxu0 %v275
  %367 = vmatpush.bf16.msra.mxu0 %v274
  %368 = vmatmul.bf16.gmra.mxu0 %v116
  %v369 = vpop.f32.mrf.mxu0
  %v370 = vadd.f32 %v351, %v369
  %v371 = vpop.f32.mrf.mxu0
  %v372 = vadd.f32 %v353, %v371
  %373 = vmatmul.bf16.gmra.mxu0 %v120
  %v374 = vpop.f32.mrf.mxu0
  %v375 = vadd.f32 %v356, %v374
  %v376 = vpop.f32.mrf.mxu0
  %v377 = vadd.f32 %v358, %v376
  %378 = vdwg.mxu0
  %379 = vmatpush.bf16.msra.mxu0 %v289
  %380 = vmatpush.bf16.msra.mxu0 %v288
  %381 = vmatpush.bf16.msra.mxu0 %v287
  %382 = vmatpush.bf16.msra.mxu0 %v286
  %383 = vmatpush.bf16.msra.mxu0 %v285
  %384 = vmatpush.bf16.msra.mxu0 %v284
  %385 = vmatpush.bf16.msra.mxu0 %v283
  %386 = vmatpush.bf16.msra.mxu0 %v282
  %387 = vmatmul.bf16.gmra.mxu0 %v117
  %v388 = vpop.f32.mrf.mxu0
  %v389 = vadd.f32 %v370, %v388
  %v390 = vpop.f32.mrf.mxu0
  %v391 = vadd.f32 %v372, %v390
  %392 = vmatmul.bf16.gmra.mxu0 %v121
  %v393 = vpop.f32.mrf.mxu0
  %v394 = vadd.f32 %v375, %v393
  %v395 = vpop.f32.mrf.mxu0
  %v396 = vadd.f32 %v377, %v395
  %397 = vdwg.mxu0
  %v398 = vmax.f32 %v389, 0.0
  %v399 = vmax.f32 %v391, 0.0
  %v400 = vmax.f32 %v394, 0.0
  %v401 = vmax.f32 %v396, 0.0
  %v402 = vpack.c.bf16 %v398, %v398
  %v403 = vpack.c.bf16 %v399, %v399
  %v404 = vpack.c.bf16 %v400, %v400
  %v405 = vpack.c.bf16 %v401, %v401
  %406 = vst [vmem:[%s3] sm:$0xf] %v402
  %407 = vst [vmem:[%s3 + $0x4] sm:$0xf] %v403
  %408 = vst [vmem:[%s3 + $0x8] sm:$0xf] %v404
  %409 = vst [vmem:[%s3 + $0xc] sm:$0xf] %v405
  // Predicated region
  $region14: #{cnn_forward.7} parent=0 // pred_check
    _
  $region15: #{cnn_forward.7} parent=0 // pred_check_branch
    %411 = sbr.rel (0) target = $region17
  $region16: #{cnn_forward.7} parent=0 // pred_region
    _
  $region17: #{cnn_forward.7} parent=0 // pred_fallthru
    _
  // Predicated region
  $region18: #{cnn_forward.7} parent=0 // pred_check
    _
  $region19: #{cnn_forward.7} parent=0 // pred_check_branch
    %413 = sbr.rel (0) target = $region21
  $region20: #{cnn_forward.7} parent=0 // pred_region
    _
  $region21: #{cnn_forward.7} parent=0 // pred_fallthru
    _

// kernel: cnn_forward.9
$region0: #{cnn_forward.9}
  #allocation0 [shape = 'u32[]', space=smem, size = 0x4, offset = 0x4, fixed_abs, tag = 'smem constant byte address 0x4 - core index']
  #allocation1 [shape = 'u32[72,128]{1,0:T(1,128)}', space=vmem, size = 0x9000, scoped, tag = 'internal scratch']
  %s0 = inlined_call_operand.vmem [shape: bf16[16,128], index: 0, kind: input, shape index: {}]
  %s1 = inlined_call_operand.vmem [shape: bf16[128,512], index: 1, kind: input, shape index: {}]
  %s2 = inlined_call_operand.vmem [shape: f32[1,512], index: 2, kind: input, shape index: {}]
  %s3 = inlined_call_operand.vmem [shape: bf16[16,512], index: 3, kind: output, shape index: {}]
  %s4 = sld [smem:[#allocation0]]
  $region22: #{cnn_forward.9} parent=0
    _
  %s6 = ssub.s32 1, %s4
  %s7 = scalar_select 0, %s6, %s4
  // Predicated region
  $region2: #{cnn_forward.9} parent=0 // pred_check
    _
  $region3: #{cnn_forward.9} parent=0 // pred_check_branch
    %9 = sbr.rel (0) target = $region5
  $region4: #{cnn_forward.9} parent=0 // pred_region
    _
  $region5: #{cnn_forward.9} parent=0 // pred_fallthru
    _
  // Predicated region
  $region6: #{cnn_forward.9} parent=0 // pred_check
    _
  $region7: #{cnn_forward.9} parent=0 // pred_check_branch
    %11 = sbr.rel (0) target = $region9
  $region8: #{cnn_forward.9} parent=0 // pred_region
    _
  $region9: #{cnn_forward.9} parent=0 // pred_fallthru
    _
  // Predicated region
  $region10: #{cnn_forward.9} parent=0 // pred_check
    _
  $region11: #{cnn_forward.9} parent=0 // pred_check_branch
    %13 = sbr.rel (0) target = $region13
  $region12: #{cnn_forward.9} parent=0 // pred_region
    _
  $region13: #{cnn_forward.9} parent=0 // pred_fallthru
    _
  %v14 = vld [vmem:[%s0] sm:$0xf]
  %v15 = vld [vmem:[%s0 + $0x4] sm:$0xf]
  %v16 = vld [vmem:[%s1] sm:$0xff]
  %v17 = vld [vmem:[%s1 + $0x8] sm:$0xff]
  %v18 = vld [vmem:[%s1 + $0x10] sm:$0xff]
  %v19 = vld [vmem:[%s1 + $0x18] sm:$0xff]
  %v20 = vld [vmem:[%s1 + $0x20] sm:$0xff]
  %v21 = vld [vmem:[%s1 + $0x28] sm:$0xff]
  %v22 = vld [vmem:[%s1 + $0x30] sm:$0xff]
  %v23 = vld [vmem:[%s1 + $0x38] sm:$0xff]
  %v24 = vld [vmem:[%s1 + $0x40] sm:$0xff]
  %v25 = vld [vmem:[%s1 + $0x48] sm:$0xff]
  %v26 = vld [vmem:[%s1 + $0x50] sm:$0xff]
  %v27 = vld [vmem:[%s1 + $0x58] sm:$0xff]
  %v28 = vld [vmem:[%s1 + $0x60] sm:$0xff]
  %v29 = vld [vmem:[%s1 + $0x68] sm:$0xff]
  %v30 = vld [vmem:[%s1 + $0x70] sm:$0xff]
  %v31 = vld [vmem:[%s1 + $0x78] sm:$0xff]
  %v32 = vld [vmem:[%s1 + $0x80] sm:$0xff]
  %v33 = vld [vmem:[%s1 + $0x88] sm:$0xff]
  %v34 = vld [vmem:[%s1 + $0x90] sm:$0xff]
  %v35 = vld [vmem:[%s1 + $0x98] sm:$0xff]
  %v36 = vld [vmem:[%s1 + $0xa0] sm:$0xff]
  %v37 = vld [vmem:[%s1 + $0xa8] sm:$0xff]
  %v38 = vld [vmem:[%s1 + $0xb0] sm:$0xff]
  %v39 = vld [vmem:[%s1 + $0xb8] sm:$0xff]
  %v40 = vld [vmem:[%s1 + $0xc0] sm:$0xff]
  %v41 = vld [vmem:[%s1 + $0xc8] sm:$0xff]
  %v42 = vld [vmem:[%s1 + $0xd0] sm:$0xff]
  %v43 = vld [vmem:[%s1 + $0xd8] sm:$0xff]
  %v44 = vld [vmem:[%s1 + $0xe0] sm:$0xff]
  %v45 = vld [vmem:[%s1 + $0xe8] sm:$0xff]
  %v46 = vld [vmem:[%s1 + $0xf0] sm:$0xff]
  %v47 = vld [vmem:[%s1 + $0xf8] sm:$0xff]
  %v48 = vld [vmem:[%s2] sm:$0xf]
  %v50 = vperm.slane %v48, 0
  %v51 = vperm.slane %v48, 1
  %v52 = vperm.slane %v48, 2
  %v53 = vperm.slane %v48, 3
  %v60 = vunpack.c.l.b16 %v14
  %v61 = vunpack.c.l.b16 %v15
  %v62 = vpack.c.b16 %v61, %v60
  %v96 = vunpack.c.l.b16 %v16
  %v97 = vunpack.c.h.b16 %v16
  %v98 = vunpack.c.l.b16 %v17
  %v99 = vunpack.c.h.b16 %v17
  %v100 = vunpack.c.l.b16 %v18
  %v101 = vunpack.c.h.b16 %v18
  %v102 = vunpack.c.l.b16 %v19
  %v103 = vunpack.c.h.b16 %v19
  %v104 = vunpack.c.l.b16 %v20
  %v105 = vunpack.c.h.b16 %v20
  %v106 = vunpack.c.l.b16 %v21
  %v107 = vunpack.c.h.b16 %v21
  %v108 = vunpack.c.l.b16 %v22
  %v109 = vunpack.c.h.b16 %v22
  %v110 = vunpack.c.l.b16 %v23
  %v111 = vunpack.c.h.b16 %v23
  %v112 = vunpack.c.l.b16 %v24
  %v113 = vunpack.c.h.b16 %v24
  %v114 = vunpack.c.l.b16 %v25
  %v115 = vunpack.c.h.b16 %v25
  %v116 = vunpack.c.l.b16 %v26
  %v117 = vunpack.c.h.b16 %v26
  %v118 = vunpack.c.l.b16 %v27
  %v119 = vunpack.c.h.b16 %v27
  %v120 = vunpack.c.l.b16 %v28
  %v121 = vunpack.c.h.b16 %v28
  %v122 = vunpack.c.l.b16 %v29
  %v123 = vunpack.c.h.b16 %v29
  %v124 = vunpack.c.l.b16 %v30
  %v125 = vunpack.c.h.b16 %v30
  %v126 = vunpack.c.l.b16 %v31
  %v127 = vunpack.c.h.b16 %v31
  %v128 = vunpack.c.l.b16 %v32
  %v129 = vunpack.c.h.b16 %v32
  %v130 = vunpack.c.l.b16 %v33
  %v131 = vunpack.c.h.b16 %v33
  %v132 = vunpack.c.l.b16 %v34
  %v133 = vunpack.c.h.b16 %v34
  %v134 = vunpack.c.l.b16 %v35
  %v135 = vunpack.c.h.b16 %v35
  %v136 = vunpack.c.l.b16 %v36
  %v137 = vunpack.c.h.b16 %v36
  %v138 = vunpack.c.l.b16 %v37
  %v139 = vunpack.c.h.b16 %v37
  %v140 = vunpack.c.l.b16 %v38
  %v141 = vunpack.c.h.b16 %v38
  %v142 = vunpack.c.l.b16 %v39
  %v143 = vunpack.c.h.b16 %v39
  %v144 = vunpack.c.l.b16 %v40
  %v145 = vunpack.c.h.b16 %v40
  %v146 = vunpack.c.l.b16 %v41
  %v147 = vunpack.c.h.b16 %v41
  %v148 = vunpack.c.l.b16 %v42
  %v149 = vunpack.c.h.b16 %v42
  %v150 = vunpack.c.l.b16 %v43
  %v151 = vunpack.c.h.b16 %v43
  %v152 = vunpack.c.l.b16 %v44
  %v153 = vunpack.c.h.b16 %v44
  %v154 = vunpack.c.l.b16 %v45
  %v155 = vunpack.c.h.b16 %v45
  %v156 = vunpack.c.l.b16 %v46
  %v157 = vunpack.c.h.b16 %v46
  %v158 = vunpack.c.l.b16 %v47
  %v159 = vunpack.c.h.b16 %v47
  %v160 = vpack.c.b16 %v100, %v96
  %v161 = vpack.c.b16 %v101, %v97
  %v162 = vpack.c.b16 %v102, %v98
  %v163 = vpack.c.b16 %v103, %v99
  %v164 = vpack.c.b16 %v108, %v104
  %v165 = vpack.c.b16 %v109, %v105
  %v166 = vpack.c.b16 %v110, %v106
  %v167 = vpack.c.b16 %v111, %v107
  %v168 = vpack.c.b16 %v116, %v112
  %v169 = vpack.c.b16 %v117, %v113
  %v170 = vpack.c.b16 %v118, %v114
  %v171 = vpack.c.b16 %v119, %v115
  %v172 = vpack.c.b16 %v124, %v120
  %v173 = vpack.c.b16 %v125, %v121
  %v174 = vpack.c.b16 %v126, %v122
  %v175 = vpack.c.b16 %v127, %v123
  %v176 = vpack.c.b16 %v132, %v128
  %v177 = vpack.c.b16 %v133, %v129
  %v178 = vpack.c.b16 %v134, %v130
  %v179 = vpack.c.b16 %v135, %v131
  %v180 = vpack.c.b16 %v140, %v136
  %v181 = vpack.c.b16 %v141, %v137
  %v182 = vpack.c.b16 %v142, %v138
  %v183 = vpack.c.b16 %v143, %v139
  %v184 = vpack.c.b16 %v148, %v144
  %v185 = vpack.c.b16 %v149, %v145
  %v186 = vpack.c.b16 %v150, %v146
  %v187 = vpack.c.b16 %v151, %v147
  %v188 = vpack.c.b16 %v156, %v152
  %v189 = vpack.c.b16 %v157, %v153
  %v190 = vpack.c.b16 %v158, %v154
  %v191 = vpack.c.b16 %v159, %v155
  %224 = vmatpush.bf16.msra.mxu0 %v188
  %225 = vmatpush.bf16.msra.mxu0 %v184
  %226 = vmatpush.bf16.msra.mxu0 %v180
  %227 = vmatpush.bf16.msra.mxu0 %v176
  %228 = vmatpush.bf16.msra.mxu0 %v172
  %229 = vmatpush.bf16.msra.mxu0 %v168
  %230 = vmatpush.bf16.msra.mxu0 %v164
  %231 = vmatpush.bf16.msra.mxu0 %v160
  %232 = vmatmul.bf16.gmra.mxu0 %v62
  %v233 = vpop.f32.mrf.mxu0
  %v234 = vadd.f32 %v50, %v233
  %v235 = vpop.f32.mrf.mxu0
  %v236 = vadd.f32 %v50, %v235
  %237 = vdwg.mxu0
  %238 = vmatpush.bf16.msra.mxu0 %v189
  %239 = vmatpush.bf16.msra.mxu0 %v185
  %240 = vmatpush.bf16.msra.mxu0 %v181
  %241 = vmatpush.bf16.msra.mxu0 %v177
  %242 = vmatpush.bf16.msra.mxu0 %v173
  %243 = vmatpush.bf16.msra.mxu0 %v169
  %244 = vmatpush.bf16.msra.mxu0 %v165
  %245 = vmatpush.bf16.msra.mxu0 %v161
  %246 = vmatmul.bf16.gmra.mxu0 %v62
  %v247 = vpop.f32.mrf.mxu0
  %v248 = vadd.f32 %v51, %v247
  %v249 = vpop.f32.mrf.mxu0
  %v250 = vadd.f32 %v51, %v249
  %251 = vdwg.mxu0
  %252 = vmatpush.bf16.msra.mxu0 %v190
  %253 = vmatpush.bf16.msra.mxu0 %v186
  %254 = vmatpush.bf16.msra.mxu0 %v182
  %255 = vmatpush.bf16.msra.mxu0 %v178
  %256 = vmatpush.bf16.msra.mxu0 %v174
  %257 = vmatpush.bf16.msra.mxu0 %v170
  %258 = vmatpush.bf16.msra.mxu0 %v166
  %259 = vmatpush.bf16.msra.mxu0 %v162
  %260 = vmatmul.bf16.gmra.mxu0 %v62
  %v261 = vpop.f32.mrf.mxu0
  %v262 = vadd.f32 %v52, %v261
  %v263 = vpop.f32.mrf.mxu0
  %v264 = vadd.f32 %v52, %v263
  %265 = vdwg.mxu0
  %266 = vmatpush.bf16.msra.mxu0 %v191
  %267 = vmatpush.bf16.msra.mxu0 %v187
  %268 = vmatpush.bf16.msra.mxu0 %v183
  %269 = vmatpush.bf16.msra.mxu0 %v179
  %270 = vmatpush.bf16.msra.mxu0 %v175
  %271 = vmatpush.bf16.msra.mxu0 %v171
  %272 = vmatpush.bf16.msra.mxu0 %v167
  %273 = vmatpush.bf16.msra.mxu0 %v163
  %274 = vmatmul.bf16.gmra.mxu0 %v62
  %v275 = vpop.f32.mrf.mxu0
  %v276 = vadd.f32 %v53, %v275
  %v277 = vpop.f32.mrf.mxu0
  %v278 = vadd.f32 %v53, %v277
  %279 = vdwg.mxu0
  %v280 = vmax.f32 %v234, 0.0
  %v281 = vmax.f32 %v248, 0.0
  %v282 = vmax.f32 %v262, 0.0
  %v283 = vmax.f32 %v276, 0.0
  %v284 = vmax.f32 %v236, 0.0
  %v285 = vmax.f32 %v250, 0.0
  %v286 = vmax.f32 %v264, 0.0
  %v287 = vmax.f32 %v278, 0.0
  %v288 = vpack.c.bf16 %v281, %v280
  %v289 = vpack.c.bf16 %v283, %v282
  %v290 = vpack.c.bf16 %v285, %v284
  %v291 = vpack.c.bf16 %v287, %v286
  %292 = vst [vmem:[%s3] sm:$0xff] %v288
  %293 = vst [vmem:[%s3 + $0x8] sm:$0xff] %v289
  %294 = vst [vmem:[%s3 + $0x10] sm:$0xff] %v290
  %295 = vst [vmem:[%s3 + $0x18] sm:$0xff] %v291
  // Predicated region
  $region14: #{cnn_forward.9} parent=0 // pred_check
    _
  $region15: #{cnn_forward.9} parent=0 // pred_check_branch
    %297 = sbr.rel (0) target = $region17
  $region16: #{cnn_forward.9} parent=0 // pred_region
    _
  $region17: #{cnn_forward.9} parent=0 // pred_fallthru
    _
  // Predicated region
  $region18: #{cnn_forward.9} parent=0 // pred_check
    _
  $region19: #{cnn_forward.9} parent=0 // pred_check_branch
    %299 = sbr.rel (0) target = $region21
  $region20: #{cnn_forward.9} parent=0 // pred_region
    _
  $region21: #{cnn_forward.9} parent=0 // pred_fallthru
    _

// kernel: cnn_forward.8
$region0: #{cnn_forward.8}
  #allocation0 [shape = 'u32[]', space=smem, size = 0x4, offset = 0x4, fixed_abs, tag = 'smem constant byte address 0x4 - core index']
  #allocation1 [shape = 'u32[72,128]{1,0:T(1,128)}', space=vmem, size = 0x9000, scoped, tag = 'internal scratch']
  %s0 = inlined_call_operand.vmem [shape: bf16[16,640], index: 0, kind: input, shape index: {}]
  %s1 = inlined_call_operand.vmem [shape: bf16[640,128], index: 1, kind: input, shape index: {}]
  %s2 = inlined_call_operand.vmem [shape: f32[1,128], index: 2, kind: input, shape index: {}]
  %s3 = inlined_call_operand.vmem [shape: bf16[16,128], index: 3, kind: output, shape index: {}]
  %s4 = sld [smem:[#allocation0]]
  $region22: #{cnn_forward.8} parent=0
    _
  %s6 = ssub.s32 1, %s4
  %s7 = scalar_select 0, %s6, %s4
  // Predicated region
  $region2: #{cnn_forward.8} parent=0 // pred_check
    _
  $region3: #{cnn_forward.8} parent=0 // pred_check_branch
    %9 = sbr.rel (0) target = $region5
  $region4: #{cnn_forward.8} parent=0 // pred_region
    _
  $region5: #{cnn_forward.8} parent=0 // pred_fallthru
    _
  // Predicated region
  $region6: #{cnn_forward.8} parent=0 // pred_check
    _
  $region7: #{cnn_forward.8} parent=0 // pred_check_branch
    %11 = sbr.rel (0) target = $region9
  $region8: #{cnn_forward.8} parent=0 // pred_region
    _
  $region9: #{cnn_forward.8} parent=0 // pred_fallthru
    _
  // Predicated region
  $region10: #{cnn_forward.8} parent=0 // pred_check
    _
  $region11: #{cnn_forward.8} parent=0 // pred_check_branch
    %13 = sbr.rel (0) target = $region13
  $region12: #{cnn_forward.8} parent=0 // pred_region
    _
  $region13: #{cnn_forward.8} parent=0 // pred_fallthru
    _
  %v14 = vld [vmem:[%s0] sm:$0xff]
  %v15 = vld [vmem:[%s0 + $0x8] sm:$0xff]
  %v16 = vld [vmem:[%s0 + $0x10] sm:$0xf]
  %v17 = vld [vmem:[%s0 + $0x14] sm:$0xff]
  %v18 = vld [vmem:[%s0 + $0x1c] sm:$0xff]
  %v19 = vld [vmem:[%s0 + $0x24] sm:$0xf]
  %v20 = vld [vmem:[%s1] sm:$0xf]
  %v21 = vld [vmem:[%s1 + $0x4] sm:$0xf]
  %v22 = vld [vmem:[%s1 + $0x8] sm:$0xf]
  %v23 = vld [vmem:[%s1 + $0xc] sm:$0xf]
  %v24 = vld [vmem:[%s1 + $0x10] sm:$0xf]
  %v25 = vld [vmem:[%s1 + $0x14] sm:$0xf]
  %v26 = vld [vmem:[%s1 + $0x18] sm:$0xf]
  %v27 = vld [vmem:[%s1 + $0x1c] sm:$0xf]
  %v28 = vld [vmem:[%s1 + $0x20] sm:$0xf]
  %v29 = vld [vmem:[%s1 + $0x24] sm:$0xf]
  %v30 = vld [vmem:[%s1 + $0x28] sm:$0xf]
  %v31 = vld [vmem:[%s1 + $0x2c] sm:$0xf]
  %v32 = vld [vmem:[%s1 + $0x30] sm:$0xf]
  %v33 = vld [vmem:[%s1 + $0x34] sm:$0xf]
  %v34 = vld [vmem:[%s1 + $0x38] sm:$0xf]
  %v35 = vld [vmem:[%s1 + $0x3c] sm:$0xf]
  %v36 = vld [vmem:[%s1 + $0x40] sm:$0xf]
  %v37 = vld [vmem:[%s1 + $0x44] sm:$0xf]
  %v38 = vld [vmem:[%s1 + $0x48] sm:$0xf]
  %v39 = vld [vmem:[%s1 + $0x4c] sm:$0xf]
  %v40 = vld [vmem:[%s1 + $0x50] sm:$0xf]
  %v41 = vld [vmem:[%s1 + $0x54] sm:$0xf]
  %v42 = vld [vmem:[%s1 + $0x58] sm:$0xf]
  %v43 = vld [vmem:[%s1 + $0x5c] sm:$0xf]
  %v44 = vld [vmem:[%s1 + $0x60] sm:$0xf]
  %v45 = vld [vmem:[%s1 + $0x64] sm:$0xf]
  %v46 = vld [vmem:[%s1 + $0x68] sm:$0xf]
  %v47 = vld [vmem:[%s1 + $0x6c] sm:$0xf]
  %v48 = vld [vmem:[%s1 + $0x70] sm:$0xf]
  %v49 = vld [vmem:[%s1 + $0x74] sm:$0xf]
  %v50 = vld [vmem:[%s1 + $0x78] sm:$0xf]
  %v51 = vld [vmem:[%s1 + $0x7c] sm:$0xf]
  %v52 = vld [vmem:[%s1 + $0x80] sm:$0xf]
  %v53 = vld [vmem:[%s1 + $0x84] sm:$0xf]
  %v54 = vld [vmem:[%s1 + $0x88] sm:$0xf]
  %v55 = vld [vmem:[%s1 + $0x8c] sm:$0xf]
  %v56 = vld [vmem:[%s1 + $0x90] sm:$0xf]
  %v57 = vld [vmem:[%s1 + $0x94] sm:$0xf]
  %v58 = vld [vmem:[%s1 + $0x98] sm:$0xf]
  %v59 = vld [vmem:[%s1 + $0x9c] sm:$0xf]
  %v60 = vld [vmem:[%s1 + $0xa0] sm:$0xf]
  %v61 = vld [vmem:[%s1 + $0xa4] sm:$0xf]
  %v62 = vld [vmem:[%s1 + $0xa8] sm:$0xf]
  %v63 = vld [vmem:[%s1 + $0xac] sm:$0xf]
  %v64 = vld [vmem:[%s1 + $0xb0] sm:$0xf]
  %v65 = vld [vmem:[%s1 + $0xb4] sm:$0xf]
  %v66 = vld [vmem:[%s1 + $0xb8] sm:$0xf]
  %v67 = vld [vmem:[%s1 + $0xbc] sm:$0xf]
  %v68 = vld [vmem:[%s1 + $0xc0] sm:$0xf]
  %v69 = vld [vmem:[%s1 + $0xc4] sm:$0xf]
  %v70 = vld [vmem:[%s1 + $0xc8] sm:$0xf]
  %v71 = vld [vmem:[%s1 + $0xcc] sm:$0xf]
  %v72 = vld [vmem:[%s1 + $0xd0] sm:$0xf]
  %v73 = vld [vmem:[%s1 + $0xd4] sm:$0xf]
  %v74 = vld [vmem:[%s1 + $0xd8] sm:$0xf]
  %v75 = vld [vmem:[%s1 + $0xdc] sm:$0xf]
  %v76 = vld [vmem:[%s1 + $0xe0] sm:$0xf]
  %v77 = vld [vmem:[%s1 + $0xe4] sm:$0xf]
  %v78 = vld [vmem:[%s1 + $0xe8] sm:$0xf]
  %v79 = vld [vmem:[%s1 + $0xec] sm:$0xf]
  %v80 = vld [vmem:[%s1 + $0xf0] sm:$0xf]
  %v81 = vld [vmem:[%s1 + $0xf4] sm:$0xf]
  %v82 = vld [vmem:[%s1 + $0xf8] sm:$0xf]
  %v83 = vld [vmem:[%s1 + $0xfc] sm:$0xf]
  %v84 = vld [vmem:[%s1 + $0x100] sm:$0xf]
  %v85 = vld [vmem:[%s1 + $0x104] sm:$0xf]
  %v86 = vld [vmem:[%s1 + $0x108] sm:$0xf]
  %v87 = vld [vmem:[%s1 + $0x10c] sm:$0xf]
  %v88 = vld [vmem:[%s1 + $0x110] sm:$0xf]
  %v89 = vld [vmem:[%s1 + $0x114] sm:$0xf]
  %v90 = vld [vmem:[%s1 + $0x118] sm:$0xf]
  %v91 = vld [vmem:[%s1 + $0x11c] sm:$0xf]
  %v92 = vld [vmem:[%s1 + $0x120] sm:$0xf]
  %v93 = vld [vmem:[%s1 + $0x124] sm:$0xf]
  %v94 = vld [vmem:[%s1 + $0x128] sm:$0xf]
  %v95 = vld [vmem:[%s1 + $0x12c] sm:$0xf]
  %v96 = vld [vmem:[%s1 + $0x130] sm:$0xf]
  %v97 = vld [vmem:[%s1 + $0x134] sm:$0xf]
  %v98 = vld [vmem:[%s1 + $0x138] sm:$0xf]
  %v99 = vld [vmem:[%s1 + $0x13c] sm:$0xf]
  %v100 = vld [vmem:[%s2] sm:$0x1]
  %v102 = vperm.slane %v100, 0
  %v110 = vunpack.c.l.b16 %v14
  %v111 = vunpack.c.h.b16 %v14
  %v112 = vunpack.c.l.b16 %v15
  %v113 = vunpack.c.h.b16 %v15
  %v114 = vunpack.c.l.b16 %v16
  %v115 = vunpack.c.l.b16 %v17
  %v116 = vunpack.c.h.b16 %v17
  %v117 = vunpack.c.l.b16 %v18
  %v118 = vunpack.c.h.b16 %v18
  %v119 = vunpack.c.l.b16 %v19
  %v120 = vpack.c.b16 %v115, %v110
  %v121 = vpack.c.b16 %v116, %v111
  %v122 = vpack.c.b16 %v117, %v112
  %v123 = vpack.c.b16 %v118, %v113
  %v124 = vpack.c.b16 %v119, %v114
  %v210 = vunpack.c.l.b16 %v20
  %v211 = vunpack.c.l.b16 %v21
  %v212 = vunpack.c.l.b16 %v22
  %v213 = vunpack.c.l.b16 %v23
  %v214 = vunpack.c.l.b16 %v24
  %v215 = vunpack.c.l.b16 %v25
  %v216 = vunpack.c.l.b16 %v26
  %v217 = vunpack.c.l.b16 %v27
  %v218 = vunpack.c.l.b16 %v28
  %v219 = vunpack.c.l.b16 %v29
  %v220 = vunpack.c.l.b16 %v30
  %v221 = vunpack.c.l.b16 %v31
  %v222 = vunpack.c.l.b16 %v32
  %v223 = vunpack.c.l.b16 %v33
  %v224 = vunpack.c.l.b16 %v34
  %v225 = vunpack.c.l.b16 %v35
  %v226 = vunpack.c.l.b16 %v36
  %v227 = vunpack.c.l.b16 %v37
  %v228 = vunpack.c.l.b16 %v38
  %v229 = vunpack.c.l.b16 %v39
  %v230 = vunpack.c.l.b16 %v40
  %v231 = vunpack.c.l.b16 %v41
  %v232 = vunpack.c.l.b16 %v42
  %v233 = vunpack.c.l.b16 %v43
  %v234 = vunpack.c.l.b16 %v44
  %v235 = vunpack.c.l.b16 %v45
  %v236 = vunpack.c.l.b16 %v46
  %v237 = vunpack.c.l.b16 %v47
  %v238 = vunpack.c.l.b16 %v48
  %v239 = vunpack.c.l.b16 %v49
  %v240 = vunpack.c.l.b16 %v50
  %v241 = vunpack.c.l.b16 %v51
  %v242 = vunpack.c.l.b16 %v52
  %v243 = vunpack.c.l.b16 %v53
  %v244 = vunpack.c.l.b16 %v54
  %v245 = vunpack.c.l.b16 %v55
  %v246 = vunpack.c.l.b16 %v56
  %v247 = vunpack.c.l.b16 %v57
  %v248 = vunpack.c.l.b16 %v58
  %v249 = vunpack.c.l.b16 %v59
  %v250 = vunpack.c.l.b16 %v60
  %v251 = vunpack.c.l.b16 %v61
  %v252 = vunpack.c.l.b16 %v62
  %v253 = vunpack.c.l.b16 %v63
  %v254 = vunpack.c.l.b16 %v64
  %v255 = vunpack.c.l.b16 %v65
  %v256 = vunpack.c.l.b16 %v66
  %v257 = vunpack.c.l.b16 %v67
  %v258 = vunpack.c.l.b16 %v68
  %v259 = vunpack.c.l.b16 %v69
  %v260 = vunpack.c.l.b16 %v70
  %v261 = vunpack.c.l.b16 %v71
  %v262 = vunpack.c.l.b16 %v72
  %v263 = vunpack.c.l.b16 %v73
  %v264 = vunpack.c.l.b16 %v74
  %v265 = vunpack.c.l.b16 %v75
  %v266 = vunpack.c.l.b16 %v76
  %v267 = vunpack.c.l.b16 %v77
  %v268 = vunpack.c.l.b16 %v78
  %v269 = vunpack.c.l.b16 %v79
  %v270 = vunpack.c.l.b16 %v80
  %v271 = vunpack.c.l.b16 %v81
  %v272 = vunpack.c.l.b16 %v82
  %v273 = vunpack.c.l.b16 %v83
  %v274 = vunpack.c.l.b16 %v84
  %v275 = vunpack.c.l.b16 %v85
  %v276 = vunpack.c.l.b16 %v86
  %v277 = vunpack.c.l.b16 %v87
  %v278 = vunpack.c.l.b16 %v88
  %v279 = vunpack.c.l.b16 %v89
  %v280 = vunpack.c.l.b16 %v90
  %v281 = vunpack.c.l.b16 %v91
  %v282 = vunpack.c.l.b16 %v92
  %v283 = vunpack.c.l.b16 %v93
  %v284 = vunpack.c.l.b16 %v94
  %v285 = vunpack.c.l.b16 %v95
  %v286 = vunpack.c.l.b16 %v96
  %v287 = vunpack.c.l.b16 %v97
  %v288 = vunpack.c.l.b16 %v98
  %v289 = vunpack.c.l.b16 %v99
  %v290 = vpack.c.b16 %v211, %v210
  %v291 = vpack.c.b16 %v213, %v212
  %v292 = vpack.c.b16 %v215, %v214
  %v293 = vpack.c.b16 %v217, %v216
  %v294 = vpack.c.b16 %v219, %v218
  %v295 = vpack.c.b16 %v221, %v220
  %v296 = vpack.c.b16 %v223, %v222
  %v297 = vpack.c.b16 %v225, %v224
  %v298 = vpack.c.b16 %v227, %v226
  %v299 = vpack.c.b16 %v229, %v228
  %v300 = vpack.c.b16 %v231, %v230
  %v301 = vpack.c.b16 %v233, %v232
  %v302 = vpack.c.b16 %v235, %v234
  %v303 = vpack.c.b16 %v237, %v236
  %v304 = vpack.c.b16 %v239, %v238
  %v305 = vpack.c.b16 %v241, %v240
  %v306 = vpack.c.b16 %v243, %v242
  %v307 = vpack.c.b16 %v245, %v244
  %v308 = vpack.c.b16 %v247, %v246
  %v309 = vpack.c.b16 %v249, %v248
  %v310 = vpack.c.b16 %v251, %v250
  %v311 = vpack.c.b16 %v253, %v252
  %v312 = vpack.c.b16 %v255, %v254
  %v313 = vpack.c.b16 %v257, %v256
  %v314 = vpack.c.b16 %v259, %v258
  %v315 = vpack.c.b16 %v261, %v260
  %v316 = vpack.c.b16 %v263, %v262
  %v317 = vpack.c.b16 %v265, %v264
  %v318 = vpack.c.b16 %v267, %v266
  %v319 = vpack.c.b16 %v269, %v268
  %v320 = vpack.c.b16 %v271, %v270
  %v321 = vpack.c.b16 %v273, %v272
  %v322 = vpack.c.b16 %v275, %v274
  %v323 = vpack.c.b16 %v277, %v276
  %v324 = vpack.c.b16 %v279, %v278
  %v325 = vpack.c.b16 %v281, %v280
  %v326 = vpack.c.b16 %v283, %v282
  %v327 = vpack.c.b16 %v285, %v284
  %v328 = vpack.c.b16 %v287, %v286
  %v329 = vpack.c.b16 %v289, %v288
  %370 = vmatpush.bf16.msra.mxu0 %v297
  %371 = vmatpush.bf16.msra.mxu0 %v296
  %372 = vmatpush.bf16.msra.mxu0 %v295
  %373 = vmatpush.bf16.msra.mxu0 %v294
  %374 = vmatpush.bf16.msra.mxu0 %v293
  %375 = vmatpush.bf16.msra.mxu0 %v292
  %376 = vmatpush.bf16.msra.mxu0 %v291
  %377 = vmatpush.bf16.msra.mxu0 %v290
  %378 = vmatmul.bf16.gmra.mxu0 %v120
  %v379 = vpop.f32.mrf.mxu0
  %v380 = vadd.f32 %v102, %v379
  %v381 = vpop.f32.mrf.mxu0
  %v382 = vadd.f32 %v102, %v381
  %383 = vdwg.mxu0
  %384 = vmatpush.bf16.msra.mxu0 %v305
  %385 = vmatpush.bf16.msra.mxu0 %v304
  %386 = vmatpush.bf16.msra.mxu0 %v303
  %387 = vmatpush.bf16.msra.mxu0 %v302
  %388 = vmatpush.bf16.msra.mxu0 %v301
  %389 = vmatpush.bf16.msra.mxu0 %v300
  %390 = vmatpush.bf16.msra.mxu0 %v299
  %391 = vmatpush.bf16.msra.mxu0 %v298
  %392 = vmatmul.bf16.gmra.mxu0 %v121
  %v393 = vpop.f32.mrf.mxu0
  %v394 = vadd.f32 %v380, %v393
  %v395 = vpop.f32.mrf.mxu0
  %v396 = vadd.f32 %v382, %v395
  %397 = vdwg.mxu0
  %398 = vmatpush.bf16.msra.mxu0 %v313
  %399 = vmatpush.bf16.msra.mxu0 %v312
  %400 = vmatpush.bf16.msra.mxu0 %v311
  %401 = vmatpush.bf16.msra.mxu0 %v310
  %402 = vmatpush.bf16.msra.mxu0 %v309
  %403 = vmatpush.bf16.msra.mxu0 %v308
  %404 = vmatpush.bf16.msra.mxu0 %v307
  %405 = vmatpush.bf16.msra.mxu0 %v306
  %406 = vmatmul.bf16.gmra.mxu0 %v122
  %v407 = vpop.f32.mrf.mxu0
  %v408 = vadd.f32 %v394, %v407
  %v409 = vpop.f32.mrf.mxu0
  %v410 = vadd.f32 %v396, %v409
  %411 = vdwg.mxu0
  %412 = vmatpush.bf16.msra.mxu0 %v321
  %413 = vmatpush.bf16.msra.mxu0 %v320
  %414 = vmatpush.bf16.msra.mxu0 %v319
  %415 = vmatpush.bf16.msra.mxu0 %v318
  %416 = vmatpush.bf16.msra.mxu0 %v317
  %417 = vmatpush.bf16.msra.mxu0 %v316
  %418 = vmatpush.bf16.msra.mxu0 %v315
  %419 = vmatpush.bf16.msra.mxu0 %v314
  %420 = vmatmul.bf16.gmra.mxu0 %v123
  %v421 = vpop.f32.mrf.mxu0
  %v422 = vadd.f32 %v408, %v421
  %v423 = vpop.f32.mrf.mxu0
  %v424 = vadd.f32 %v410, %v423
  %425 = vdwg.mxu0
  %426 = vmatpush.bf16.msra.mxu0 %v329
  %427 = vmatpush.bf16.msra.mxu0 %v328
  %428 = vmatpush.bf16.msra.mxu0 %v327
  %429 = vmatpush.bf16.msra.mxu0 %v326
  %430 = vmatpush.bf16.msra.mxu0 %v325
  %431 = vmatpush.bf16.msra.mxu0 %v324
  %432 = vmatpush.bf16.msra.mxu0 %v323
  %433 = vmatpush.bf16.msra.mxu0 %v322
  %434 = vmatmul.bf16.gmra.mxu0 %v124
  %v435 = vpop.f32.mrf.mxu0
  %v436 = vadd.f32 %v422, %v435
  %v437 = vpop.f32.mrf.mxu0
  %v438 = vadd.f32 %v424, %v437
  %439 = vdwg.mxu0
  %v440 = vmax.f32 %v436, 0.0
  %v441 = vmax.f32 %v438, 0.0
  %v442 = vpack.c.bf16 %v440, %v440
  %v443 = vpack.c.bf16 %v441, %v441
  %444 = vst [vmem:[%s3] sm:$0xf] %v442
  %445 = vst [vmem:[%s3 + $0x4] sm:$0xf] %v443
  // Predicated region
  $region14: #{cnn_forward.8} parent=0 // pred_check
    _
  $region15: #{cnn_forward.8} parent=0 // pred_check_branch
    %447 = sbr.rel (0) target = $region17
  $region16: #{cnn_forward.8} parent=0 // pred_region
    _
  $region17: #{cnn_forward.8} parent=0 // pred_fallthru
    _
  // Predicated region
  $region18: #{cnn_forward.8} parent=0 // pred_check
    _
  $region19: #{cnn_forward.8} parent=0 // pred_check_branch
    %449 = sbr.rel (0) target = $region21
  $region20: #{cnn_forward.8} parent=0 // pred_region
    _
  $region21: #{cnn_forward.8} parent=0 // pred_fallthru
    _

// kernel: cnn_forward.10
$region0: #{cnn_forward.10}
  #allocation0 [shape = 'u32[]', space=smem, size = 0x4, offset = 0x4, fixed_abs, tag = 'smem constant byte address 0x4 - core index']
  #allocation1 [shape = 'u32[72,128]{1,0:T(1,128)}', space=vmem, size = 0x9000, scoped, tag = 'internal scratch']
  %s0 = inlined_call_operand.vmem [shape: bf16[16,512], index: 0, kind: input, shape index: {}]
  %s1 = inlined_call_operand.vmem [shape: bf16[512,128], index: 1, kind: input, shape index: {}]
  %s2 = inlined_call_operand.vmem [shape: f32[1,128], index: 2, kind: input, shape index: {}]
  %s3 = inlined_call_operand.vmem [shape: f32[16,128], index: 3, kind: output, shape index: {}]
  %s4 = sld [smem:[#allocation0]]
  $region22: #{cnn_forward.10} parent=0
    _
  %s6 = ssub.s32 1, %s4
  %s7 = scalar_select 0, %s6, %s4
  // Predicated region
  $region2: #{cnn_forward.10} parent=0 // pred_check
    _
  $region3: #{cnn_forward.10} parent=0 // pred_check_branch
    %9 = sbr.rel (0) target = $region5
  $region4: #{cnn_forward.10} parent=0 // pred_region
    _
  $region5: #{cnn_forward.10} parent=0 // pred_fallthru
    _
  // Predicated region
  $region6: #{cnn_forward.10} parent=0 // pred_check
    _
  $region7: #{cnn_forward.10} parent=0 // pred_check_branch
    %11 = sbr.rel (0) target = $region9
  $region8: #{cnn_forward.10} parent=0 // pred_region
    _
  $region9: #{cnn_forward.10} parent=0 // pred_fallthru
    _
  // Predicated region
  $region10: #{cnn_forward.10} parent=0 // pred_check
    _
  $region11: #{cnn_forward.10} parent=0 // pred_check_branch
    %13 = sbr.rel (0) target = $region13
  $region12: #{cnn_forward.10} parent=0 // pred_region
    _
  $region13: #{cnn_forward.10} parent=0 // pred_fallthru
    _
  %v14 = vld [vmem:[%s0] sm:$0xff]
  %v15 = vld [vmem:[%s0 + $0x8] sm:$0xff]
  %v16 = vld [vmem:[%s0 + $0x10] sm:$0xff]
  %v17 = vld [vmem:[%s0 + $0x18] sm:$0xff]
  %v18 = vld [vmem:[%s1] sm:$0xf]
  %v19 = vld [vmem:[%s1 + $0x4] sm:$0xf]
  %v20 = vld [vmem:[%s1 + $0x8] sm:$0xf]
  %v21 = vld [vmem:[%s1 + $0xc] sm:$0xf]
  %v22 = vld [vmem:[%s1 + $0x10] sm:$0xf]
  %v23 = vld [vmem:[%s1 + $0x14] sm:$0xf]
  %v24 = vld [vmem:[%s1 + $0x18] sm:$0xf]
  %v25 = vld [vmem:[%s1 + $0x1c] sm:$0xf]
  %v26 = vld [vmem:[%s1 + $0x20] sm:$0xf]
  %v27 = vld [vmem:[%s1 + $0x24] sm:$0xf]
  %v28 = vld [vmem:[%s1 + $0x28] sm:$0xf]
  %v29 = vld [vmem:[%s1 + $0x2c] sm:$0xf]
  %v30 = vld [vmem:[%s1 + $0x30] sm:$0xf]
  %v31 = vld [vmem:[%s1 + $0x34] sm:$0xf]
  %v32 = vld [vmem:[%s1 + $0x38] sm:$0xf]
  %v33 = vld [vmem:[%s1 + $0x3c] sm:$0xf]
  %v34 = vld [vmem:[%s1 + $0x40] sm:$0xf]
  %v35 = vld [vmem:[%s1 + $0x44] sm:$0xf]
  %v36 = vld [vmem:[%s1 + $0x48] sm:$0xf]
  %v37 = vld [vmem:[%s1 + $0x4c] sm:$0xf]
  %v38 = vld [vmem:[%s1 + $0x50] sm:$0xf]
  %v39 = vld [vmem:[%s1 + $0x54] sm:$0xf]
  %v40 = vld [vmem:[%s1 + $0x58] sm:$0xf]
  %v41 = vld [vmem:[%s1 + $0x5c] sm:$0xf]
  %v42 = vld [vmem:[%s1 + $0x60] sm:$0xf]
  %v43 = vld [vmem:[%s1 + $0x64] sm:$0xf]
  %v44 = vld [vmem:[%s1 + $0x68] sm:$0xf]
  %v45 = vld [vmem:[%s1 + $0x6c] sm:$0xf]
  %v46 = vld [vmem:[%s1 + $0x70] sm:$0xf]
  %v47 = vld [vmem:[%s1 + $0x74] sm:$0xf]
  %v48 = vld [vmem:[%s1 + $0x78] sm:$0xf]
  %v49 = vld [vmem:[%s1 + $0x7c] sm:$0xf]
  %v50 = vld [vmem:[%s1 + $0x80] sm:$0xf]
  %v51 = vld [vmem:[%s1 + $0x84] sm:$0xf]
  %v52 = vld [vmem:[%s1 + $0x88] sm:$0xf]
  %v53 = vld [vmem:[%s1 + $0x8c] sm:$0xf]
  %v54 = vld [vmem:[%s1 + $0x90] sm:$0xf]
  %v55 = vld [vmem:[%s1 + $0x94] sm:$0xf]
  %v56 = vld [vmem:[%s1 + $0x98] sm:$0xf]
  %v57 = vld [vmem:[%s1 + $0x9c] sm:$0xf]
  %v58 = vld [vmem:[%s1 + $0xa0] sm:$0xf]
  %v59 = vld [vmem:[%s1 + $0xa4] sm:$0xf]
  %v60 = vld [vmem:[%s1 + $0xa8] sm:$0xf]
  %v61 = vld [vmem:[%s1 + $0xac] sm:$0xf]
  %v62 = vld [vmem:[%s1 + $0xb0] sm:$0xf]
  %v63 = vld [vmem:[%s1 + $0xb4] sm:$0xf]
  %v64 = vld [vmem:[%s1 + $0xb8] sm:$0xf]
  %v65 = vld [vmem:[%s1 + $0xbc] sm:$0xf]
  %v66 = vld [vmem:[%s1 + $0xc0] sm:$0xf]
  %v67 = vld [vmem:[%s1 + $0xc4] sm:$0xf]
  %v68 = vld [vmem:[%s1 + $0xc8] sm:$0xf]
  %v69 = vld [vmem:[%s1 + $0xcc] sm:$0xf]
  %v70 = vld [vmem:[%s1 + $0xd0] sm:$0xf]
  %v71 = vld [vmem:[%s1 + $0xd4] sm:$0xf]
  %v72 = vld [vmem:[%s1 + $0xd8] sm:$0xf]
  %v73 = vld [vmem:[%s1 + $0xdc] sm:$0xf]
  %v74 = vld [vmem:[%s1 + $0xe0] sm:$0xf]
  %v75 = vld [vmem:[%s1 + $0xe4] sm:$0xf]
  %v76 = vld [vmem:[%s1 + $0xe8] sm:$0xf]
  %v77 = vld [vmem:[%s1 + $0xec] sm:$0xf]
  %v78 = vld [vmem:[%s1 + $0xf0] sm:$0xf]
  %v79 = vld [vmem:[%s1 + $0xf4] sm:$0xf]
  %v80 = vld [vmem:[%s1 + $0xf8] sm:$0xf]
  %v81 = vld [vmem:[%s1 + $0xfc] sm:$0xf]
  %v82 = vld [vmem:[%s2] sm:$0x1]
  %v84 = vperm.slane %v82, 0
  %v90 = vunpack.c.l.b16 %v14
  %v91 = vunpack.c.h.b16 %v14
  %v92 = vunpack.c.l.b16 %v15
  %v93 = vunpack.c.h.b16 %v15
  %v94 = vunpack.c.l.b16 %v16
  %v95 = vunpack.c.h.b16 %v16
  %v96 = vunpack.c.l.b16 %v17
  %v97 = vunpack.c.h.b16 %v17
  %v98 = vpack.c.b16 %v94, %v90
  %v99 = vpack.c.b16 %v95, %v91
  %v100 = vpack.c.b16 %v96, %v92
  %v101 = vpack.c.b16 %v97, %v93
  %v170 = vunpack.c.l.b16 %v18
  %v171 = vunpack.c.l.b16 %v19
  %v172 = vunpack.c.l.b16 %v20
  %v173 = vunpack.c.l.b16 %v21
  %v174 = vunpack.c.l.b16 %v22
  %v175 = vunpack.c.l.b16 %v23
  %v176 = vunpack.c.l.b16 %v24
  %v177 = vunpack.c.l.b16 %v25
  %v178 = vunpack.c.l.b16 %v26
  %v179 = vunpack.c.l.b16 %v27
  %v180 = vunpack.c.l.b16 %v28
  %v181 = vunpack.c.l.b16 %v29
  %v182 = vunpack.c.l.b16 %v30
  %v183 = vunpack.c.l.b16 %v31
  %v184 = vunpack.c.l.b16 %v32
  %v185 = vunpack.c.l.b16 %v33
  %v186 = vunpack.c.l.b16 %v34
  %v187 = vunpack.c.l.b16 %v35
  %v188 = vunpack.c.l.b16 %v36
  %v189 = vunpack.c.l.b16 %v37
  %v190 = vunpack.c.l.b16 %v38
  %v191 = vunpack.c.l.b16 %v39
  %v192 = vunpack.c.l.b16 %v40
  %v193 = vunpack.c.l.b16 %v41
  %v194 = vunpack.c.l.b16 %v42
  %v195 = vunpack.c.l.b16 %v43
  %v196 = vunpack.c.l.b16 %v44
  %v197 = vunpack.c.l.b16 %v45
  %v198 = vunpack.c.l.b16 %v46
  %v199 = vunpack.c.l.b16 %v47
  %v200 = vunpack.c.l.b16 %v48
  %v201 = vunpack.c.l.b16 %v49
  %v202 = vunpack.c.l.b16 %v50
  %v203 = vunpack.c.l.b16 %v51
  %v204 = vunpack.c.l.b16 %v52
  %v205 = vunpack.c.l.b16 %v53
  %v206 = vunpack.c.l.b16 %v54
  %v207 = vunpack.c.l.b16 %v55
  %v208 = vunpack.c.l.b16 %v56
  %v209 = vunpack.c.l.b16 %v57
  %v210 = vunpack.c.l.b16 %v58
  %v211 = vunpack.c.l.b16 %v59
  %v212 = vunpack.c.l.b16 %v60
  %v213 = vunpack.c.l.b16 %v61
  %v214 = vunpack.c.l.b16 %v62
  %v215 = vunpack.c.l.b16 %v63
  %v216 = vunpack.c.l.b16 %v64
  %v217 = vunpack.c.l.b16 %v65
  %v218 = vunpack.c.l.b16 %v66
  %v219 = vunpack.c.l.b16 %v67
  %v220 = vunpack.c.l.b16 %v68
  %v221 = vunpack.c.l.b16 %v69
  %v222 = vunpack.c.l.b16 %v70
  %v223 = vunpack.c.l.b16 %v71
  %v224 = vunpack.c.l.b16 %v72
  %v225 = vunpack.c.l.b16 %v73
  %v226 = vunpack.c.l.b16 %v74
  %v227 = vunpack.c.l.b16 %v75
  %v228 = vunpack.c.l.b16 %v76
  %v229 = vunpack.c.l.b16 %v77
  %v230 = vunpack.c.l.b16 %v78
  %v231 = vunpack.c.l.b16 %v79
  %v232 = vunpack.c.l.b16 %v80
  %v233 = vunpack.c.l.b16 %v81
  %v234 = vpack.c.b16 %v171, %v170
  %v235 = vpack.c.b16 %v173, %v172
  %v236 = vpack.c.b16 %v175, %v174
  %v237 = vpack.c.b16 %v177, %v176
  %v238 = vpack.c.b16 %v179, %v178
  %v239 = vpack.c.b16 %v181, %v180
  %v240 = vpack.c.b16 %v183, %v182
  %v241 = vpack.c.b16 %v185, %v184
  %v242 = vpack.c.b16 %v187, %v186
  %v243 = vpack.c.b16 %v189, %v188
  %v244 = vpack.c.b16 %v191, %v190
  %v245 = vpack.c.b16 %v193, %v192
  %v246 = vpack.c.b16 %v195, %v194
  %v247 = vpack.c.b16 %v197, %v196
  %v248 = vpack.c.b16 %v199, %v198
  %v249 = vpack.c.b16 %v201, %v200
  %v250 = vpack.c.b16 %v203, %v202
  %v251 = vpack.c.b16 %v205, %v204
  %v252 = vpack.c.b16 %v207, %v206
  %v253 = vpack.c.b16 %v209, %v208
  %v254 = vpack.c.b16 %v211, %v210
  %v255 = vpack.c.b16 %v213, %v212
  %v256 = vpack.c.b16 %v215, %v214
  %v257 = vpack.c.b16 %v217, %v216
  %v258 = vpack.c.b16 %v219, %v218
  %v259 = vpack.c.b16 %v221, %v220
  %v260 = vpack.c.b16 %v223, %v222
  %v261 = vpack.c.b16 %v225, %v224
  %v262 = vpack.c.b16 %v227, %v226
  %v263 = vpack.c.b16 %v229, %v228
  %v264 = vpack.c.b16 %v231, %v230
  %v265 = vpack.c.b16 %v233, %v232
  %298 = vmatpush.bf16.msra.mxu0 %v241
  %299 = vmatpush.bf16.msra.mxu0 %v240
  %300 = vmatpush.bf16.msra.mxu0 %v239
  %301 = vmatpush.bf16.msra.mxu0 %v238
  %302 = vmatpush.bf16.msra.mxu0 %v237
  %303 = vmatpush.bf16.msra.mxu0 %v236
  %304 = vmatpush.bf16.msra.mxu0 %v235
  %305 = vmatpush.bf16.msra.mxu0 %v234
  %306 = vmatmul.bf16.gmra.mxu0 %v98
  %v307 = vpop.f32.mrf.mxu0
  %v308 = vadd.f32 %v84, %v307
  %v309 = vpop.f32.mrf.mxu0
  %v310 = vadd.f32 %v84, %v309
  %311 = vdwg.mxu0
  %312 = vmatpush.bf16.msra.mxu0 %v249
  %313 = vmatpush.bf16.msra.mxu0 %v248
  %314 = vmatpush.bf16.msra.mxu0 %v247
  %315 = vmatpush.bf16.msra.mxu0 %v246
  %316 = vmatpush.bf16.msra.mxu0 %v245
  %317 = vmatpush.bf16.msra.mxu0 %v244
  %318 = vmatpush.bf16.msra.mxu0 %v243
  %319 = vmatpush.bf16.msra.mxu0 %v242
  %320 = vmatmul.bf16.gmra.mxu0 %v99
  %v321 = vpop.f32.mrf.mxu0
  %v322 = vadd.f32 %v308, %v321
  %v323 = vpop.f32.mrf.mxu0
  %v324 = vadd.f32 %v310, %v323
  %325 = vdwg.mxu0
  %326 = vmatpush.bf16.msra.mxu0 %v257
  %327 = vmatpush.bf16.msra.mxu0 %v256
  %328 = vmatpush.bf16.msra.mxu0 %v255
  %329 = vmatpush.bf16.msra.mxu0 %v254
  %330 = vmatpush.bf16.msra.mxu0 %v253
  %331 = vmatpush.bf16.msra.mxu0 %v252
  %332 = vmatpush.bf16.msra.mxu0 %v251
  %333 = vmatpush.bf16.msra.mxu0 %v250
  %334 = vmatmul.bf16.gmra.mxu0 %v100
  %v335 = vpop.f32.mrf.mxu0
  %v336 = vadd.f32 %v322, %v335
  %v337 = vpop.f32.mrf.mxu0
  %v338 = vadd.f32 %v324, %v337
  %339 = vdwg.mxu0
  %340 = vmatpush.bf16.msra.mxu0 %v265
  %341 = vmatpush.bf16.msra.mxu0 %v264
  %342 = vmatpush.bf16.msra.mxu0 %v263
  %343 = vmatpush.bf16.msra.mxu0 %v262
  %344 = vmatpush.bf16.msra.mxu0 %v261
  %345 = vmatpush.bf16.msra.mxu0 %v260
  %346 = vmatpush.bf16.msra.mxu0 %v259
  %347 = vmatpush.bf16.msra.mxu0 %v258
  %348 = vmatmul.bf16.gmra.mxu0 %v101
  %v349 = vpop.f32.mrf.mxu0
  %v350 = vadd.f32 %v336, %v349
  %v351 = vpop.f32.mrf.mxu0
  %v352 = vadd.f32 %v338, %v351
  %353 = vdwg.mxu0
  %354 = vst [vmem:[%s3] sm:$0xff] %v350
  %355 = vst [vmem:[%s3 + $0x8] sm:$0xff] %v352
  // Predicated region
  $region14: #{cnn_forward.10} parent=0 // pred_check
    _
  $region15: #{cnn_forward.10} parent=0 // pred_check_branch
    %357 = sbr.rel (0) target = $region17
  $region16: #{cnn_forward.10} parent=0 // pred_region
    _
  $region17: #{cnn_forward.10} parent=0 // pred_fallthru
    _
  // Predicated region
  $region18: #{cnn_forward.10} parent=0 // pred_check
    _
  $region19: #{cnn_forward.10} parent=0 // pred_check_branch
    %359 = sbr.rel (0) target = $region21
  $region20: #{cnn_forward.10} parent=0 // pred_region
    _
  $region21: #{cnn_forward.10} parent=0 // pred_fallthru
    _

// kernel: cnn_forward.11
$region0: #{cnn_forward.11}
  #allocation0 [shape = 'u32[]', space=smem, size = 0x4, offset = 0x4, fixed_abs, tag = 'smem constant byte address 0x4 - core index']
  #allocation1 [shape = 'u32[72,128]{1,0:T(1,128)}', space=vmem, size = 0x9000, scoped, tag = 'internal scratch']
  %s0 = inlined_call_operand.vmem [shape: f32[2,6,4], index: 0, kind: input, shape index: {}]
  %s1 = inlined_call_operand.vmem [shape: f32[2,6,4], index: 1, kind: output, shape index: {}]
  %s2 = sld [smem:[#allocation0]]
  $region14: #{cnn_forward.11} parent=0
    _
  %s4 = ssub.s32 1, %s2
  %s5 = scalar_select 0, %s4, %s2
  // Predicated region
  $region2: #{cnn_forward.11} parent=0 // pred_check
    _
  $region3: #{cnn_forward.11} parent=0 // pred_check_branch
    %7 = sbr.rel (0) target = $region5
  $region4: #{cnn_forward.11} parent=0 // pred_region
    _
  $region5: #{cnn_forward.11} parent=0 // pred_fallthru
    _
  %v8 = vld [vmem:[%s0] sm:$0x3f]
  %v9 = vld [vmem:[%s0 + $0x8] sm:$0x3f]
  %vm10 = vcmask 29696
  %v11 = vsel %vm10, %v8, -inf
  %12 = vmax.xlane.f32.xlu0 %v11
  %v13 = vpop.xlane.xlu0 %12
  %v14 = vsel %vm10, %v9, -inf
  %15 = vmax.xlane.f32.xlu0 %v14
  %v16 = vpop.xlane.xlu0 %15
  %v17 = vsub.f32 %v8, %v13
  %v18 = vsub.f32 %v9, %v16
  %v19 = vmul.f32 %v17, 1.442695
  %v20 = vpow.pop %v19
  %v21 = vmul.f32 %v18, 1.442695
  %v22 = vpow.pop %v21
  %v23 = vsel %vm10, %v20, 0.0
  %24 = vadd.xlane.f32.xlu0 %v23
  %v25 = vpop.xlane.xlu0 %24
  %v26 = vsel %vm10, %v22, 0.0
  %27 = vadd.xlane.f32.xlu0 %v26
  %v28 = vpop.xlane.xlu0 %27
  %v29 = vlog2.pop %v25
  %v30 = vmul.f32 %v29, 0.6931472
  %v31 = vlog2.pop %v28
  %v32 = vmul.f32 %v31, 0.6931472
  %v33 = vsub.f32 %v17, %v30
  %v34 = vsub.f32 %v18, %v32
  %35 = vst.msk [vmem:[%s1] sm:$0x3f] %vm10, %v33
  %36 = vst.msk [vmem:[%s1 + $0x8] sm:$0x3f] %vm10, %v34
  // Predicated region
  $region6: #{cnn_forward.11} parent=0 // pred_check
    _
  $region7: #{cnn_forward.11} parent=0 // pred_check_branch
    %38 = sbr.rel (0) target = $region9
  $region8: #{cnn_forward.11} parent=0 // pred_region
    _
  $region9: #{cnn_forward.11} parent=0 // pred_fallthru
    _
  // Predicated region
  $region10: #{cnn_forward.11} parent=0 // pred_check
    _
  $region11: #{cnn_forward.11} parent=0 // pred_check_branch
    %40 = sbr.rel (0) target = $region13
  $region12: #{cnn_forward.11} parent=0 // pred_region
    _
  $region13: #{cnn_forward.11} parent=0 // pred_fallthru
    _

</llo_original>
